<compile_context>
chip_gen: v6e
topology: v6e:2x2x1
jax: 0.10.0
libtpu: 0.0.40
codegen_flags: <defaults>
</compile_context>

<pallas_src>
import numpy as np
import jax
import jax.numpy as jnp
from jax.experimental import pallas as pl
from jax.experimental.pallas import tpu as pltpu

# ----------------------------------------------------------------------------
# Hyper-parameters (mirror config.hid_dim etc.)
# ----------------------------------------------------------------------------
HID_DIM     = 32   # config.hid_dim
EMBED_TIME  = 16   # gMAE time-embedding width
NUM_REF     = 8    # number of cls_query reference time points
NUM_CLASSES = 2
B, L, D_CH  = 2, 8, 4   # batch, sequence length, channels

H, H2, E, R, C = HID_DIM, HID_DIM // 2, EMBED_TIME, NUM_REF, NUM_CLASSES
LANE = 128

# ----------------------------------------------------------------------------
# Packed-parameter slab layout: one (48, 128) f32 buffer, one DMA.
#   rows [0, H): wc1 | w1 | w2 co-located in lanes; w3 in rows [0, H2) lanes [64, 66)
#   rows [H, H+13): one vector parameter per row (lane 0 aligned)
# ----------------------------------------------------------------------------
C_WC1 = 0
C_W1  = C_WC1 + H2          # 16
C_W2  = C_W1 + H            # 48
C_W3  = C_W2 + H2           # 64
(R_WV, R_BV, R_WC2, R_BC1, R_BC2, R_B1, R_G1, R_BE1,
 R_B2, R_G2, R_BE2, R_B3, R_C1C0) = range(H, H + 13)
SLAB_ROWS = ((R_C1C0 + 1 + 7) // 8) * 8     # = 48


# ----------------------------------------------------------------------------
# In-kernel helpers
# ----------------------------------------------------------------------------
def _gelu(x):
    # TODO(synk): PyTorch nn.GELU defaults to the exact erf form; the tanh
    # approximation is used since erf lowering is not guaranteed in Mosaic.
    c = jnp.float32(0.7978845608028654)   # sqrt(2/pi)
    return 0.5 * x * (1.0 + jnp.tanh(c * (x + 0.044715 * x * x * x)))


def _layernorm(x, gamma, beta, eps=1e-5):
    mu = jnp.mean(x, axis=-1, keepdims=True)
    var = jnp.mean((x - mu) ** 2, axis=-1, keepdims=True)
    return (x - mu) * jax.lax.rsqrt(var + jnp.float32(eps)) * gamma + beta


# ----------------------------------------------------------------------------
# Pallas kernel: one grid step == one batch tile (default: the whole batch)
# ----------------------------------------------------------------------------
def ts_classification_kernel(
    scores_ref,   # (bt, R, L)      pre-scaled mTAN scores (channel-invariant)
    vm_ref,       # (2, N, L)       [0] = values, [1] = mask, channel-major rows
    slab_ref,     # (48, 128)       packed parameters
    out_ref,      # (bt, 128)       lanes [0,C) = logits, [C, C+D) = channel weights
):
    f32 = jnp.float32
    scr = scores_ref[...]              # (bt, R, L)
    val = vm_ref[0]                    # (N, L)
    msk = vm_ref[1]                    # (N, L)
    bt, r, l = scr.shape
    n = val.shape[0]
    d = n // bt                        # channels per example

    # ---- packed parameters (single DMA, static slices) ----------------------
    wc1  = slab_ref[0:H, C_WC1:C_WC1 + H2]        # (H, H2) channel_attention[0]
    w1   = slab_ref[0:H, C_W1:C_W1 + H]           # (H, H)  head Linear(H, H)
    w2   = slab_ref[0:H, C_W2:C_W2 + H2]          # (H, H2) head Linear(H, H//2)
    w3   = slab_ref[0:H2, C_W3:C_W3 + C]          # (H2, C) head Linear(H//2, C)
    wv   = slab_ref[R_WV:R_WV + 1, 0:H]           # (1, H)  mTAN Linear(1,H) weight
    bv   = slab_ref[R_BV:R_BV + 1, 0:H]           # (1, H)  mTAN Linear(1,H) bias
    wc2r = slab_ref[R_WC2:R_WC2 + 1, 0:H2]        # (1, H2) channel_attention[2] weight^T
    bc1  = slab_ref[R_BC1:R_BC1 + 1, 0:H2]
    bc2  = slab_ref[R_BC2:R_BC2 + 1, 0:1]
    b1   = slab_ref[R_B1:R_B1 + 1, 0:H]
    g1   = slab_ref[R_G1:R_G1 + 1, 0:H]
    be1  = slab_ref[R_BE1:R_BE1 + 1, 0:H]
    b2   = slab_ref[R_B2:R_B2 + 1, 0:H2]
    g2   = slab_ref[R_G2:R_G2 + 1, 0:H2]
    be2  = slab_ref[R_BE2:R_BE2 + 1, 0:H2]
    b3   = slab_ref[R_B3:R_B3 + 1, 0:C]
    c1   = slab_ref[R_C1C0:R_C1C0 + 1, 0:1]       # wv . query_attention
    c0   = slab_ref[R_C1C0:R_C1C0 + 1, 1:2]       # bv . query_attention

    # ---- mTAN masked softmax over L (scores broadcast over the D channels) --
    mskb = msk.reshape(bt, d, l)
    valb = val.reshape(bt, d, l)
    sc = jnp.where(mskb[:, :, None, :] != 0,
                   scr[:, None, :, :], f32(-1e9))                     # (bt, D, R, L)
    sc_max = jnp.max(sc, axis=-1, keepdims=True)
    pe = jnp.exp(sc - sc_max)
    p = pe * pl.reciprocal(jnp.sum(pe, axis=-1, keepdims=True), approx=True)
    att = jnp.sum(p * valb[:, :, None, :], axis=-1).reshape(n, r)     # (N, R)

    # ---- query attention over the R reference points -------------------------
    # mtan[n,r,:] = att[n,r]*wv + bv (the Linear(1,H) value projection); its
    # contraction with query_attention folds to  att*c1 + c0,  and the weighted
    # sum over R folds back onto wv / bv (exact algebra).  Exact division here:
    # this feeds latent -> logits and channel_weights directly.
    s2 = att * c1 + c0                                                # (N, R)
    e2 = jnp.exp(s2 - jnp.max(s2, axis=-1, keepdims=True))
    w2a = e2 / jnp.sum(e2, axis=-1, keepdims=True)                    # (N, R)
    a_bar = jnp.sum(w2a * att, axis=-1, keepdims=True)                # (N, 1)
    wsum  = jnp.sum(w2a, axis=-1, keepdims=True)                      # (N, 1) == 1 up to fp
    latent = a_bar * wv + wsum * bv                                   # (N, H)

    # ---- channel attention (exact-division softmax: returned directly) ------
    h1 = _gelu(jnp.dot(latent, wc1, preferred_element_type=f32) + bc1)     # (N, H2)
    cl = jnp.sum(h1.reshape(bt, d, H2) * wc2r, axis=-1) + bc2              # (bt, D)
    ce = jnp.exp(cl - jnp.max(cl, axis=-1, keepdims=True))
    cw = ce / jnp.sum(ce, axis=-1, keepdims=True)                          # (bt, D)
    wrep = jnp.sum(cw[:, :, None] * latent.reshape(bt, d, H), axis=1)      # (bt, H)

    # ---- classification head (Dropout == identity in eval mode) -------------
    h = jnp.dot(wrep, w1, preferred_element_type=f32) + b1
    h = _gelu(_layernorm(h, g1, be1))
    h = jnp.dot(h, w2, preferred_element_type=f32) + b2
    h = _gelu(_layernorm(h, g2, be2))
    logits = jnp.dot(h, w3, preferred_element_type=f32) + b3               # (bt, C)

    # ---- single merged, lane-dense output: [logits | channel_weights | 0] ----
    out_ref[...] = jnp.concatenate(
        [logits, cw, jnp.zeros((bt, LANE - C - d), f32)], axis=-1)


# ----------------------------------------------------------------------------
# JAX glue
# ----------------------------------------------------------------------------
def learn_time_embedding(tt, te_w, te_b):
    """gMAE.learn_time_embedding: concat([Linear(1,1)(tt), sin(Linear(1,E-1)(tt))], -1)."""
    pre = tt * te_w + te_b                               # (..., E)
    return jnp.concatenate([pre[..., :1], jnp.sin(pre[..., 1:])], axis=-1)


def pack_params(p):
    """Pack all kernel-side parameters into one (48, 128) f32 slab (one DMA)."""
    slab = jnp.zeros((SLAB_ROWS, LANE), jnp.float32)

    def put(s, row, col, a):
        a = jnp.asarray(a, jnp.float32)
        return s.at[row:row + a.shape[0], col:col + a.shape[1]].set(a)

    slab = put(slab, 0, C_WC1, p["wc1"])                      # (H, H2)
    slab = put(slab, 0, C_W1,  p["w1"])                       # (H, H)
    slab = put(slab, 0, C_W2,  p["w2"])                       # (H, H2)
    slab = put(slab, 0, C_W3,  p["w3"])                       # (H2, C)
    slab = put(slab, R_WV,  0, p["wv"])
    slab = put(slab, R_BV,  0, p["bv"])
    slab = put(slab, R_WC2, 0, jnp.reshape(p["wc2"], (1, H2)))
    slab = put(slab, R_BC1, 0, p["bc1"])
    slab = put(slab, R_BC2, 0, p["bc2"])
    slab = put(slab, R_B1,  0, p["b1"])
    slab = put(slab, R_G1,  0, p["g1"])
    slab = put(slab, R_BE1, 0, p["be1"])
    slab = put(slab, R_B2,  0, p["b2"])
    slab = put(slab, R_G2,  0, p["g2"])
    slab = put(slab, R_BE2, 0, p["be2"])
    slab = put(slab, R_B3,  0, p["b3"])
    # Folded query-attention projection: qatt . (att*wv + bv) = att*c1 + c0.
    c1c0 = jnp.stack([jnp.sum(p["wv"] * p["qatt"]), jnp.sum(p["bv"] * p["qatt"])])
    slab = put(slab, R_C1C0, 0, c1c0.reshape(1, 2))
    return slab


def ts_classification_forward(value, time_steps, mask, params, batch_tile=None):
    Bv, Lv, Dv = value.shape
    assert Dv == D_CH
    bt = Bv if batch_tile is None else batch_tile
    assert Bv % bt == 0
    nb = Bv // bt
    if nb > 1:
        # Megacore path (v7x): once B >= 16, pick batch_tile so nb >= 2 and the grid
        # shards across the two TensorCores; blocks need sublane-aligned leading dims.
        assert bt % 8 == 0 and (bt * Dv) % 8 == 0
    p = params

    # Hoisted projections + channel-invariant score matmul (cheap XLA ops in the
    # wrapper; the 1/sqrt(E) scale is folded into q, which is computed here anyway).
    key_emb = learn_time_embedding(time_steps[..., None], p["te_w"], p["te_b"])   # (B, L, E)
    k = jnp.einsum("ble,ef->blf", key_emb, p["wk"]) + p["bk"]                      # (B, L, E)
    qry_emb = learn_time_embedding(p["cls_q"], p["te_w"], p["te_b"])               # (R, E)
    q = (qry_emb @ p["wq"] + p["bq"]) * jnp.float32(1.0 / np.sqrt(E))              # (R, E)
    scores = jnp.einsum("ble,re->brl", k, q)                                       # (B, R, L)

    # Channel-major value/mask merged into ONE input stream; L dense in lanes.
    val_bd = jnp.transpose(value, (0, 2, 1)).reshape(Bv * Dv, Lv)
    mask_bd = jnp.transpose(mask, (0, 2, 1)).reshape(Bv * Dv, Lv)
    vm = jnp.stack([val_bd, mask_bd], axis=0)                                      # (2, B*D, L)
    slab = pack_params(p)

    n_rows = bt * Dv
    in_specs = [
        pl.BlockSpec((bt, R, Lv), lambda i: (i, 0, 0)),
        pl.BlockSpec((2, n_rows, Lv), lambda i: (0, i, 0)),
        pl.BlockSpec((SLAB_ROWS, LANE), lambda i: (0, 0)),
    ]
    out_specs = pl.BlockSpec((bt, LANE), lambda i: (i, 0))
    out_shape = jax.ShapeDtypeStruct((Bv, LANE), jnp.float32)   # merged lane-dense slab

    out = pl.pallas_call(
        ts_classification_kernel,
        out_shape=out_shape,
        grid=(nb,),
        in_specs=in_specs,
        out_specs=out_specs,
        compiler_params=pltpu.CompilerParams(dimension_semantics=("parallel",)),
    )(scores, vm, slab)

    # TODO(synk): for B in the hundreds, switch to a batch-in-lanes (8, B) output slab to
    # cut HBM write amplification; at small B one full-width row per example is optimal.
    return {"logits": out[:, :C], "channel_weights": out[:, C:C + Dv]}


# ----------------------------------------------------------------------------
# Deterministic synthetic parameters
# ----------------------------------------------------------------------------
def init_params(key):
    keys = jax.random.split(key, 20)

    def rnd(k, shape, scale=0.1):
        return (scale * jax.random.normal(k, shape)).astype(jnp.float32)

    return {
        # learn_time_embedding: feature 0 = linear(1,1), features 1..E-1 = sin(linear(1,E-1))
        "te_w": rnd(keys[0], (1, E), 1.0),
        "te_b": rnd(keys[1], (1, E), 1.0),
        "cls_q": jnp.linspace(0.0, 1.0, R, dtype=jnp.float32).reshape(R, 1),
        # multiTimeAttention projections (num_heads=1, input_dim=1)
        "wq": rnd(keys[2], (E, E)), "bq": rnd(keys[3], (1, E)),
        "wk": rnd(keys[4], (E, E)), "bk": rnd(keys[5], (1, E)),
        "wv": rnd(keys[6], (1, H)), "bv": rnd(keys[7], (1, H)),
        # base_model.query_attention (torch shape (1,1,H) stored as (1,H))
        "qatt": rnd(keys[8], (1, H)),
        # channel_attention: Linear(H,H//2) -> GELU -> Linear(H//2,1)
        "wc1": rnd(keys[9], (H, H2)), "bc1": rnd(keys[10], (1, H2)),
        "wc2": rnd(keys[11], (H2, 1)), "bc2": rnd(keys[12], (1, 1)),
        # classification head
        "w1": rnd(keys[13], (H, H)), "b1": rnd(keys[14], (1, H)),
        "g1": jnp.ones((1, H), jnp.float32), "be1": jnp.zeros((1, H), jnp.float32),
        "w2": rnd(keys[15], (H, H2)), "b2": rnd(keys[16], (1, H2)),
        "g2": jnp.ones((1, H2), jnp.float32), "be2": jnp.zeros((1, H2), jnp.float32),
        "w3": rnd(keys[17], (H2, C)), "b3": rnd(keys[18], (1, C)),
    }


# ----------------------------------------------------------------------------
# Pure-NumPy reference (mirrors the PyTorch forward in eval mode, un-fused)
# ----------------------------------------------------------------------------
def reference_forward(value, time_steps, mask, params):
    p = {k: np.asarray(v, np.float32) for k, v in params.items()}
    value, time_steps, mask = (np.asarray(a, np.float32) for a in (value, time_steps, mask))

    def gelu(x):
        c = np.float32(0.7978845608028654)
        return 0.5 * x * (1.0 + np.tanh(c * (x + 0.044715 * x ** 3)))

    def layernorm(x, g, b, eps=1e-5):
        mu = x.mean(-1, keepdims=True)
        var = ((x - mu) ** 2).mean(-1, keepdims=True)
        return (x - mu) / np.sqrt(var + eps) * g + b

    def softmax(x, axis):
        x = x - x.max(axis=axis, keepdims=True)
        e = np.exp(x)
        return e / e.sum(axis=axis, keepdims=True)

    def time_embed(tt):
        pre = tt * p["te_w"] + p["te_b"]
        return np.concatenate([pre[..., :1], np.sin(pre[..., 1:])], axis=-1)

    Bv, Lv, Dv = value.shape
    Ev = p["te_w"].shape[1]
    logits_all, cw_all = [], []
    for b in range(Bv):
        key_emb = time_embed(time_steps[b][:, None])                  # (L, E)
        qry_emb = time_embed(p["cls_q"])                              # (R, E)
        q = qry_emb @ p["wq"] + p["bq"]
        k = key_emb @ p["wk"] + p["bk"]
        scores = q @ k.T / np.float32(np.sqrt(Ev))                    # (R, L)
        m = mask[b].T                                                 # (D, L)
        sc = np.where(m[:, None, :] != 0, scores[None], np.float32(-1e9))
        pa = softmax(sc, -1)                                          # (D, R, L)
        att = (pa * value[b].T[:, None, :]).sum(-1)                   # (D, R)
        mtan = att[:, :, None] * p["wv"][None] + p["bv"][None]        # (D, R, H)
        w2 = softmax((mtan * p["qatt"][None]).sum(-1), -1)            # (D, R)
        latent = (w2[:, :, None] * mtan).sum(1)                       # (D, H)
        h1 = gelu(latent @ p["wc1"] + p["bc1"])
        cw = softmax((h1 @ p["wc2"] + p["bc2"])[:, 0], -1)            # (D,)
        wrep = cw @ latent                                            # (H,)
        h = wrep[None] @ p["w1"] + p["b1"]
        h = gelu(layernorm(h, p["g1"], p["be1"]))
        h = h @ p["w2"] + p["b2"]
        h = gelu(layernorm(h, p["g2"], p["be2"]))
        lg = h @ p["w3"] + p["b3"]
        logits_all.append(lg[0])
        cw_all.append(cw)
    return np.stack(logits_all), np.stack(cw_all)


# ----------------------------------------------------------------------------
if __name__ == "__main__":
    root = jax.random.PRNGKey(0)
    kp, kv, kt, km = jax.random.split(root, 4)
    params = init_params(kp)

    value = jax.random.normal(kv, (B, L, D_CH), dtype=jnp.float32)
    time_steps = jnp.sort(jax.random.uniform(kt, (B, L), dtype=jnp.float32), axis=-1)
    mask = (jax.random.uniform(km, (B, L, D_CH)) > 0.3).astype(jnp.float32)

    fwd = jax.jit(ts_classification_forward)
    out = jax.block_until_ready(fwd(value, time_steps, mask, params))

    ref_logits, ref_cw = reference_forward(value, time_steps, mask, params)
    np.testing.assert_allclose(np.asarray(out["logits"]), ref_logits, atol=3e-3, rtol=3e-3)
    np.testing.assert_allclose(np.asarray(out["channel_weights"]), ref_cw, atol=3e-3, rtol=3e-3)

    print("KERNEL_OK")
</pallas_src>

<mosaic_0001>
module attributes {stable_mosaic.version = 11 : i64} {
  func.func @ts_classification_kernel(%arg0: i32, %arg1: memref<2x8x8xf32, #tpu.memory_space<vmem>>, %arg2: memref<2x8x8xf32, #tpu.memory_space<vmem>>, %arg3: memref<48x128xf32, #tpu.memory_space<vmem>>, %arg4: memref<2x128xf32, #tpu.memory_space<vmem>>) attributes {dimension_semantics = [#tpu.dimension_semantics<parallel>], iteration_bounds = array<i64: 1>, scalar_prefetch = 0 : i64, scratch_operands = 0 : i64, tpu.core_type = #tpu.core_type<tc>, window_params = [{transform_indices = @transform_0, window_bounds = array<i64: 2, 8, 8>}, {transform_indices = @transform_1, window_bounds = array<i64: 2, 8, 8>}, {pipeline_mode = #tpu.pipeline_mode<synchronous>, transform_indices = @transform_2, window_bounds = array<i64: 48, 128>}, {transform_indices = @transform_3, window_bounds = array<i64: 2, 128>}]} {
    %c0 = arith.constant 0 : index
    %c0_0 = arith.constant 0 : index
    %c0_1 = arith.constant 0 : index
    %0 = vector.load %arg1[%c0, %c0_0, %c0_1] : memref<2x8x8xf32, #tpu.memory_space<vmem>>, vector<2x8x8xf32>
    %c0_2 = arith.constant 0 : index
    %c0_3 = arith.constant 0 : index
    %c0_4 = arith.constant 0 : index
    %1 = vector.load %arg2[%c0_2, %c0_3, %c0_4] : memref<2x8x8xf32, #tpu.memory_space<vmem>>, vector<1x8x8xf32>
    %2 = vector.shape_cast %1 : vector<1x8x8xf32> to vector<8x8xf32>
    %c1 = arith.constant 1 : index
    %c0_5 = arith.constant 0 : index
    %c0_6 = arith.constant 0 : index
    %3 = vector.load %arg2[%c1, %c0_5, %c0_6] : memref<2x8x8xf32, #tpu.memory_space<vmem>>, vector<1x8x8xf32>
    %4 = vector.shape_cast %3 : vector<1x8x8xf32> to vector<8x8xf32>
    %c0_7 = arith.constant 0 : index
    %c0_8 = arith.constant 0 : index
    %5 = vector.load %arg3[%c0_7, %c0_8] : memref<48x128xf32, #tpu.memory_space<vmem>>, vector<32x16xf32>
    %c0_9 = arith.constant 0 : index
    %c16 = arith.constant 16 : index
    %6 = vector.load %arg3[%c0_9, %c16] : memref<48x128xf32, #tpu.memory_space<vmem>>, vector<32x32xf32>
    %c0_10 = arith.constant 0 : index
    %c48 = arith.constant 48 : index
    %7 = vector.load %arg3[%c0_10, %c48] : memref<48x128xf32, #tpu.memory_space<vmem>>, vector<32x16xf32>
    %c0_11 = arith.constant 0 : index
    %c64 = arith.constant 64 : index
    %8 = vector.load %arg3[%c0_11, %c64] : memref<48x128xf32, #tpu.memory_space<vmem>>, vector<16x2xf32>
    %c32 = arith.constant 32 : index
    %c0_12 = arith.constant 0 : index
    %9 = vector.load %arg3[%c32, %c0_12] : memref<48x128xf32, #tpu.memory_space<vmem>>, vector<1x32xf32>
    %c33 = arith.constant 33 : index
    %c0_13 = arith.constant 0 : index
    %10 = vector.load %arg3[%c33, %c0_13] : memref<48x128xf32, #tpu.memory_space<vmem>>, vector<1x32xf32>
    %c34 = arith.constant 34 : index
    %c0_14 = arith.constant 0 : index
    %11 = vector.load %arg3[%c34, %c0_14] : memref<48x128xf32, #tpu.memory_space<vmem>>, vector<1x16xf32>
    %c35 = arith.constant 35 : index
    %c0_15 = arith.constant 0 : index
    %12 = vector.load %arg3[%c35, %c0_15] : memref<48x128xf32, #tpu.memory_space<vmem>>, vector<1x16xf32>
    %c36 = arith.constant 36 : index
    %c0_16 = arith.constant 0 : index
    %13 = vector.load %arg3[%c36, %c0_16] : memref<48x128xf32, #tpu.memory_space<vmem>>, vector<1x1xf32>
    %c37 = arith.constant 37 : index
    %c0_17 = arith.constant 0 : index
    %14 = vector.load %arg3[%c37, %c0_17] : memref<48x128xf32, #tpu.memory_space<vmem>>, vector<1x32xf32>
    %c38 = arith.constant 38 : index
    %c0_18 = arith.constant 0 : index
    %15 = vector.load %arg3[%c38, %c0_18] : memref<48x128xf32, #tpu.memory_space<vmem>>, vector<1x32xf32>
    %c39 = arith.constant 39 : index
    %c0_19 = arith.constant 0 : index
    %16 = vector.load %arg3[%c39, %c0_19] : memref<48x128xf32, #tpu.memory_space<vmem>>, vector<1x32xf32>
    %c40 = arith.constant 40 : index
    %c0_20 = arith.constant 0 : index
    %17 = vector.load %arg3[%c40, %c0_20] : memref<48x128xf32, #tpu.memory_space<vmem>>, vector<1x16xf32>
    %c41 = arith.constant 41 : index
    %c0_21 = arith.constant 0 : index
    %18 = vector.load %arg3[%c41, %c0_21] : memref<48x128xf32, #tpu.memory_space<vmem>>, vector<1x16xf32>
    %c42 = arith.constant 42 : index
    %c0_22 = arith.constant 0 : index
    %19 = vector.load %arg3[%c42, %c0_22] : memref<48x128xf32, #tpu.memory_space<vmem>>, vector<1x16xf32>
    %c43 = arith.constant 43 : index
    %c0_23 = arith.constant 0 : index
    %20 = vector.load %arg3[%c43, %c0_23] : memref<48x128xf32, #tpu.memory_space<vmem>>, vector<1x2xf32>
    %c44 = arith.constant 44 : index
    %c0_24 = arith.constant 0 : index
    %21 = vector.load %arg3[%c44, %c0_24] : memref<48x128xf32, #tpu.memory_space<vmem>>, vector<1x1xf32>
    %c44_25 = arith.constant 44 : index
    %c1_26 = arith.constant 1 : index
    %22 = vector.load %arg3[%c44_25, %c1_26] : memref<48x128xf32, #tpu.memory_space<vmem>>, vector<1x1xf32>
    %23 = vector.shape_cast %4 : vector<8x8xf32> to vector<2x4x8xf32>
    %24 = vector.shape_cast %2 : vector<8x8xf32> to vector<2x4x8xf32>
    %25 = vector.shape_cast %23 : vector<2x4x8xf32> to vector<2x4x1x8xf32>
    %cst = arith.constant 0.000000e+00 : f32
    %26 = vector.broadcast %cst : f32 to vector<2x4x1x8xf32>
    %27 = arith.cmpf one, %25, %26 : vector<2x4x1x8xf32>
    %28 = vector.shape_cast %0 : vector<2x8x8xf32> to vector<2x1x8x8xf32>
    %cst_27 = arith.constant -1.000000e+09 : f32
    %29 = vector.shape_cast %27 : vector<2x4x1x8xi1> to vector<2x4x1x8xi1>
    %30 = vector.broadcast %29 : vector<2x4x1x8xi1> to vector<2x4x8x8xi1>
    %31 = vector.shape_cast %28 : vector<2x1x8x8xf32> to vector<2x1x8x8xf32>
    %32 = vector.broadcast %31 : vector<2x1x8x8xf32> to vector<2x4x8x8xf32>
    %33 = vector.broadcast %cst_27 : f32 to vector<2x4x8x8xf32>
    %34 = arith.select %30, %32, %33 : vector<2x4x8x8xi1>, vector<2x4x8x8xf32>
    %cst_28 = arith.constant dense<0xFF800000> : vector<2x4x8xf32>
    %35 = vector.multi_reduction <maximumf>, %34, %cst_28 [3] : vector<2x4x8x8xf32> to vector<2x4x8xf32>
    %36 = vector.shape_cast %35 : vector<2x4x8xf32> to vector<2x4x8x1xf32>
    %37 = vector.broadcast %36 : vector<2x4x8x1xf32> to vector<2x4x8x8xf32>
    %38 = arith.subf %34, %37 : vector<2x4x8x8xf32>
    %39 = math.exp %38 : vector<2x4x8x8xf32>
    %cst_29 = arith.constant dense<0.000000e+00> : vector<2x4x8xf32>
    %40 = vector.multi_reduction <add>, %39, %cst_29 [3] : vector<2x4x8x8xf32> to vector<2x4x8xf32>
    %41 = vector.shape_cast %40 : vector<2x4x8xf32> to vector<2x4x8x1xf32>
    %42 = tpu.reciprocal %41 {approx = true} : vector<2x4x8x1xf32> -> vector<2x4x8x1xf32>
    %43 = vector.broadcast %42 : vector<2x4x8x1xf32> to vector<2x4x8x8xf32>
    %44 = arith.mulf %39, %43 : vector<2x4x8x8xf32>
    %45 = vector.shape_cast %24 : vector<2x4x8xf32> to vector<2x4x1x8xf32>
    %46 = vector.broadcast %45 : vector<2x4x1x8xf32> to vector<2x4x8x8xf32>
    %47 = arith.mulf %44, %46 : vector<2x4x8x8xf32>
    %cst_30 = arith.constant dense<0.000000e+00> : vector<2x4x8xf32>
    %48 = vector.multi_reduction <add>, %47, %cst_30 [3] : vector<2x4x8x8xf32> to vector<2x4x8xf32>
    %49 = vector.shape_cast %48 : vector<2x4x8xf32> to vector<8x8xf32>
    %50 = vector.broadcast %21 : vector<1x1xf32> to vector<8x8xf32>
    %51 = arith.mulf %49, %50 : vector<8x8xf32>
    %52 = vector.broadcast %22 : vector<1x1xf32> to vector<8x8xf32>
    %53 = arith.addf %51, %52 : vector<8x8xf32>
    %cst_31 = arith.constant dense<0xFF800000> : vector<8xf32>
    %54 = vector.multi_reduction <maximumf>, %53, %cst_31 [1] : vector<8x8xf32> to vector<8xf32>
    %55 = vector.shape_cast %54 : vector<8xf32> to vector<8x1xf32>
    %56 = vector.broadcast %55 : vector<8x1xf32> to vector<8x8xf32>
    %57 = arith.subf %53, %56 : vector<8x8xf32>
    %58 = math.exp %57 : vector<8x8xf32>
    %cst_32 = arith.constant dense<0.000000e+00> : vector<8xf32>
    %59 = vector.multi_reduction <add>, %58, %cst_32 [1] : vector<8x8xf32> to vector<8xf32>
    %60 = vector.shape_cast %59 : vector<8xf32> to vector<8x1xf32>
    %61 = vector.broadcast %60 : vector<8x1xf32> to vector<8x8xf32>
    %62 = arith.divf %58, %61 : vector<8x8xf32>
    %63 = arith.mulf %62, %49 : vector<8x8xf32>
    %cst_33 = arith.constant dense<0.000000e+00> : vector<8xf32>
    %64 = vector.multi_reduction <add>, %63, %cst_33 [1] : vector<8x8xf32> to vector<8xf32>
    %65 = vector.shape_cast %64 : vector<8xf32> to vector<8x1xf32>
    %cst_34 = arith.constant dense<0.000000e+00> : vector<8xf32>
    %66 = vector.multi_reduction <add>, %62, %cst_34 [1] : vector<8x8xf32> to vector<8xf32>
    %67 = vector.shape_cast %66 : vector<8xf32> to vector<8x1xf32>
    %68 = vector.broadcast %65 : vector<8x1xf32> to vector<8x32xf32>
    %69 = vector.broadcast %9 : vector<1x32xf32> to vector<8x32xf32>
    %70 = arith.mulf %68, %69 : vector<8x32xf32>
    %71 = vector.broadcast %67 : vector<8x1xf32> to vector<8x32xf32>
    %72 = vector.broadcast %10 : vector<1x32xf32> to vector<8x32xf32>
    %73 = arith.mulf %71, %72 : vector<8x32xf32>
    %74 = arith.addf %70, %73 : vector<8x32xf32>
    %cst_35 = arith.constant dense<0.000000e+00> : vector<8x16xf32>
    %75 = tpu.matmul %74, %5, %cst_35 {dimension_numbers = #tpu.dot_dimension_numbers<[1], [0], [0], [1], [0, 0, 1, 1], [], []>} : vector<8x32xf32>, vector<32x16xf32>, vector<8x16xf32> -> vector<8x16xf32>
    %76 = vector.broadcast %12 : vector<1x16xf32> to vector<8x16xf32>
    %77 = arith.addf %75, %76 : vector<8x16xf32>
    %cst_36 = arith.constant 5.000000e-01 : f32
    %78 = vector.broadcast %cst_36 : f32 to vector<8x16xf32>
    %79 = arith.mulf %78, %77 : vector<8x16xf32>
    %cst_37 = arith.constant 4.471500e-02 : f32
    %80 = vector.broadcast %cst_37 : f32 to vector<8x16xf32>
    %81 = arith.mulf %80, %77 : vector<8x16xf32>
    %82 = arith.mulf %81, %77 : vector<8x16xf32>
    %83 = arith.mulf %82, %77 : vector<8x16xf32>
    %84 = arith.addf %77, %83 : vector<8x16xf32>
    %cst_38 = arith.constant 0.797884583 : f32
    %85 = vector.broadcast %cst_38 : f32 to vector<8x16xf32>
    %86 = arith.mulf %85, %84 : vector<8x16xf32>
    %87 = math.tanh %86 : vector<8x16xf32>
    %cst_39 = arith.constant 1.000000e+00 : f32
    %88 = vector.broadcast %cst_39 : f32 to vector<8x16xf32>
    %89 = arith.addf %88, %87 : vector<8x16xf32>
    %90 = arith.mulf %79, %89 : vector<8x16xf32>
    %91 = vector.shape_cast %90 : vector<8x16xf32> to vector<2x4x16xf32>
    %92 = vector.shape_cast %11 : vector<1x16xf32> to vector<1x1x16xf32>
    %93 = vector.broadcast %92 : vector<1x1x16xf32> to vector<2x4x16xf32>
    %94 = arith.mulf %91, %93 : vector<2x4x16xf32>
    %cst_40 = arith.constant dense<0.000000e+00> : vector<2x4xf32>
    %95 = vector.multi_reduction <add>, %94, %cst_40 [2] : vector<2x4x16xf32> to vector<2x4xf32>
    %96 = vector.broadcast %13 : vector<1x1xf32> to vector<2x4xf32>
    %97 = arith.addf %95, %96 : vector<2x4xf32>
    %cst_41 = arith.constant dense<0xFF800000> : vector<2xf32>
    %98 = vector.multi_reduction <maximumf>, %97, %cst_41 [1] : vector<2x4xf32> to vector<2xf32>
    %99 = vector.shape_cast %98 : vector<2xf32> to vector<2x1xf32>
    %100 = vector.broadcast %99 : vector<2x1xf32> to vector<2x4xf32>
    %101 = arith.subf %97, %100 : vector<2x4xf32>
    %102 = math.exp %101 : vector<2x4xf32>
    %cst_42 = arith.constant dense<0.000000e+00> : vector<2xf32>
    %103 = vector.multi_reduction <add>, %102, %cst_42 [1] : vector<2x4xf32> to vector<2xf32>
    %104 = vector.shape_cast %103 : vector<2xf32> to vector<2x1xf32>
    %105 = vector.broadcast %104 : vector<2x1xf32> to vector<2x4xf32>
    %106 = arith.divf %102, %105 : vector<2x4xf32>
    %107 = vector.shape_cast %106 : vector<2x4xf32> to vector<2x4x1xf32>
    %108 = vector.shape_cast %74 : vector<8x32xf32> to vector<2x4x32xf32>
    %109 = vector.broadcast %107 : vector<2x4x1xf32> to vector<2x4x32xf32>
    %110 = arith.mulf %109, %108 : vector<2x4x32xf32>
    %cst_43 = arith.constant dense<0.000000e+00> : vector<2x32xf32>
    %111 = vector.multi_reduction <add>, %110, %cst_43 [1] : vector<2x4x32xf32> to vector<2x32xf32>
    %cst_44 = arith.constant dense<0.000000e+00> : vector<2x32xf32>
    %112 = tpu.matmul %111, %6, %cst_44 {dimension_numbers = #tpu.dot_dimension_numbers<[1], [0], [0], [1], [0, 0, 1, 1], [], []>} : vector<2x32xf32>, vector<32x32xf32>, vector<2x32xf32> -> vector<2x32xf32>
    %113 = vector.broadcast %14 : vector<1x32xf32> to vector<2x32xf32>
    %114 = arith.addf %112, %113 : vector<2x32xf32>
    %cst_45 = arith.constant dense<0.000000e+00> : vector<2xf32>
    %115 = vector.multi_reduction <add>, %114, %cst_45 [1] : vector<2x32xf32> to vector<2xf32>
    %116 = vector.shape_cast %115 : vector<2xf32> to vector<2x1xf32>
    %cst_46 = arith.constant 3.200000e+01 : f32
    %117 = vector.broadcast %cst_46 : f32 to vector<2x1xf32>
    %118 = arith.divf %116, %117 : vector<2x1xf32>
    %119 = vector.broadcast %118 : vector<2x1xf32> to vector<2x32xf32>
    %120 = arith.subf %114, %119 : vector<2x32xf32>
    %121 = arith.mulf %120, %120 : vector<2x32xf32>
    %cst_47 = arith.constant dense<0.000000e+00> : vector<2xf32>
    %122 = vector.multi_reduction <add>, %121, %cst_47 [1] : vector<2x32xf32> to vector<2xf32>
    %123 = vector.shape_cast %122 : vector<2xf32> to vector<2x1xf32>
    %cst_48 = arith.constant 3.200000e+01 : f32
    %124 = vector.broadcast %cst_48 : f32 to vector<2x1xf32>
    %125 = arith.divf %123, %124 : vector<2x1xf32>
    %126 = vector.broadcast %118 : vector<2x1xf32> to vector<2x32xf32>
    %127 = arith.subf %114, %126 : vector<2x32xf32>
    %cst_49 = arith.constant 9.99999974E-6 : f32
    %128 = vector.broadcast %cst_49 : f32 to vector<2x1xf32>
    %129 = arith.addf %125, %128 : vector<2x1xf32>
    %130 = math.rsqrt %129 : vector<2x1xf32>
    %131 = vector.broadcast %130 : vector<2x1xf32> to vector<2x32xf32>
    %132 = arith.mulf %127, %131 : vector<2x32xf32>
    %133 = vector.broadcast %15 : vector<1x32xf32> to vector<2x32xf32>
    %134 = arith.mulf %132, %133 : vector<2x32xf32>
    %135 = vector.broadcast %16 : vector<1x32xf32> to vector<2x32xf32>
    %136 = arith.addf %134, %135 : vector<2x32xf32>
    %cst_50 = arith.constant 5.000000e-01 : f32
    %137 = vector.broadcast %cst_50 : f32 to vector<2x32xf32>
    %138 = arith.mulf %137, %136 : vector<2x32xf32>
    %cst_51 = arith.constant 4.471500e-02 : f32
    %139 = vector.broadcast %cst_51 : f32 to vector<2x32xf32>
    %140 = arith.mulf %139, %136 : vector<2x32xf32>
    %141 = arith.mulf %140, %136 : vector<2x32xf32>
    %142 = arith.mulf %141, %136 : vector<2x32xf32>
    %143 = arith.addf %136, %142 : vector<2x32xf32>
    %cst_52 = arith.constant 0.797884583 : f32
    %144 = vector.broadcast %cst_52 : f32 to vector<2x32xf32>
    %145 = arith.mulf %144, %143 : vector<2x32xf32>
    %146 = math.tanh %145 : vector<2x32xf32>
    %cst_53 = arith.constant 1.000000e+00 : f32
    %147 = vector.broadcast %cst_53 : f32 to vector<2x32xf32>
    %148 = arith.addf %147, %146 : vector<2x32xf32>
    %149 = arith.mulf %138, %148 : vector<2x32xf32>
    %cst_54 = arith.constant dense<0.000000e+00> : vector<2x16xf32>
    %150 = tpu.matmul %149, %7, %cst_54 {dimension_numbers = #tpu.dot_dimension_numbers<[1], [0], [0], [1], [0, 0, 1, 1], [], []>} : vector<2x32xf32>, vector<32x16xf32>, vector<2x16xf32> -> vector<2x16xf32>
    %151 = vector.broadcast %17 : vector<1x16xf32> to vector<2x16xf32>
    %152 = arith.addf %150, %151 : vector<2x16xf32>
    %cst_55 = arith.constant dense<0.000000e+00> : vector<2xf32>
    %153 = vector.multi_reduction <add>, %152, %cst_55 [1] : vector<2x16xf32> to vector<2xf32>
    %154 = vector.shape_cast %153 : vector<2xf32> to vector<2x1xf32>
    %cst_56 = arith.constant 1.600000e+01 : f32
    %155 = vector.broadcast %cst_56 : f32 to vector<2x1xf32>
    %156 = arith.divf %154, %155 : vector<2x1xf32>
    %157 = vector.broadcast %156 : vector<2x1xf32> to vector<2x16xf32>
    %158 = arith.subf %152, %157 : vector<2x16xf32>
    %159 = arith.mulf %158, %158 : vector<2x16xf32>
    %cst_57 = arith.constant dense<0.000000e+00> : vector<2xf32>
    %160 = vector.multi_reduction <add>, %159, %cst_57 [1] : vector<2x16xf32> to vector<2xf32>
    %161 = vector.shape_cast %160 : vector<2xf32> to vector<2x1xf32>
    %cst_58 = arith.constant 1.600000e+01 : f32
    %162 = vector.broadcast %cst_58 : f32 to vector<2x1xf32>
    %163 = arith.divf %161, %162 : vector<2x1xf32>
    %164 = vector.broadcast %156 : vector<2x1xf32> to vector<2x16xf32>
    %165 = arith.subf %152, %164 : vector<2x16xf32>
    %cst_59 = arith.constant 9.99999974E-6 : f32
    %166 = vector.broadcast %cst_59 : f32 to vector<2x1xf32>
    %167 = arith.addf %163, %166 : vector<2x1xf32>
    %168 = math.rsqrt %167 : vector<2x1xf32>
    %169 = vector.broadcast %168 : vector<2x1xf32> to vector<2x16xf32>
    %170 = arith.mulf %165, %169 : vector<2x16xf32>
    %171 = vector.broadcast %18 : vector<1x16xf32> to vector<2x16xf32>
    %172 = arith.mulf %170, %171 : vector<2x16xf32>
    %173 = vector.broadcast %19 : vector<1x16xf32> to vector<2x16xf32>
    %174 = arith.addf %172, %173 : vector<2x16xf32>
    %cst_60 = arith.constant 5.000000e-01 : f32
    %175 = vector.broadcast %cst_60 : f32 to vector<2x16xf32>
    %176 = arith.mulf %175, %174 : vector<2x16xf32>
    %cst_61 = arith.constant 4.471500e-02 : f32
    %177 = vector.broadcast %cst_61 : f32 to vector<2x16xf32>
    %178 = arith.mulf %177, %174 : vector<2x16xf32>
    %179 = arith.mulf %178, %174 : vector<2x16xf32>
    %180 = arith.mulf %179, %174 : vector<2x16xf32>
    %181 = arith.addf %174, %180 : vector<2x16xf32>
    %cst_62 = arith.constant 0.797884583 : f32
    %182 = vector.broadcast %cst_62 : f32 to vector<2x16xf32>
    %183 = arith.mulf %182, %181 : vector<2x16xf32>
    %184 = math.tanh %183 : vector<2x16xf32>
    %cst_63 = arith.constant 1.000000e+00 : f32
    %185 = vector.broadcast %cst_63 : f32 to vector<2x16xf32>
    %186 = arith.addf %185, %184 : vector<2x16xf32>
    %187 = arith.mulf %176, %186 : vector<2x16xf32>
    %cst_64 = arith.constant dense<0.000000e+00> : vector<2x2xf32>
    %188 = tpu.matmul %187, %8, %cst_64 {dimension_numbers = #tpu.dot_dimension_numbers<[1], [0], [0], [1], [0, 0, 1, 1], [], []>} : vector<2x16xf32>, vector<16x2xf32>, vector<2x2xf32> -> vector<2x2xf32>
    %189 = vector.broadcast %20 : vector<1x2xf32> to vector<2x2xf32>
    %190 = arith.addf %188, %189 : vector<2x2xf32>
    %cst_65 = arith.constant 0.000000e+00 : f32
    %191 = vector.broadcast %cst_65 : f32 to vector<2x122xf32>
    %192 = tpu.concatenate %190, %106, %191 in 1 : vector<2x2xf32>, vector<2x4xf32>, vector<2x122xf32> -> vector<2x128xf32>
    %c0_66 = arith.constant 0 : index
    %c0_67 = arith.constant 0 : index
    %193 = vector.load %arg4[%c0_66, %c0_67] : memref<2x128xf32, #tpu.memory_space<vmem>>, vector<2x128xf32>
    tpu.vector_store %arg4[%c0_66, %c0_67], %192 {strides = array<i32>} : memref<2x128xf32, #tpu.memory_space<vmem>>, vector<2x128xf32>,
    return
  }
  func.func @transform_0(%arg0: i32) -> (i32, i32, i32) {
    %c0_i32 = arith.constant 0 : i32
    %c0_i32_0 = arith.constant 0 : i32
    %c0_i32_1 = arith.constant 0 : i32
    return %arg0, %c0_i32, %c0_i32_0 : i32, i32, i32
  }
  func.func @transform_1(%arg0: i32) -> (i32, i32, i32) {
    %c0_i32 = arith.constant 0 : i32
    %c0_i32_0 = arith.constant 0 : i32
    %c0_i32_1 = arith.constant 0 : i32
    return %c0_i32, %arg0, %c0_i32_0 : i32, i32, i32
  }
  func.func @transform_2(%arg0: i32) -> (i32, i32) {
    %c0_i32 = arith.constant 0 : i32
    %c0_i32_0 = arith.constant 0 : i32
    %c0_i32_1 = arith.constant 0 : i32
    return %c0_i32, %c0_i32_0 : i32, i32
  }
  func.func @transform_3(%arg0: i32) -> (i32, i32) {
    %c0_i32 = arith.constant 0 : i32
    %c0_i32_0 = arith.constant 0 : i32
    return %arg0, %c0_i32 : i32, i32
  }
}

</mosaic_0001>

<llo_original>
// kernel: ts_classification_forward.1
$region0: #{ts_classification_forward.1}
  #allocation0 [shape = 'u32[]', space=smem, size = 0x4, offset = 0x4, fixed_abs, tag = 'smem constant byte address 0x4 - core index']
  #allocation1 [shape = 'u32[144,128]{1,0:T(1,128)}', space=vmem, size = 0x12000, scoped, tag = 'internal scratch']
  %s0 = inlined_call_operand.vmem [shape: f32[2,8,8], index: 0, kind: input, shape index: {}]
  %s1 = inlined_call_operand.vmem [shape: f32[2,8,8], index: 1, kind: input, shape index: {}]
  %s2 = inlined_call_operand.vmem [shape: f32[48,128], index: 2, kind: input, shape index: {}]
  %s3 = inlined_call_operand.vmem [shape: f32[2,128], index: 3, kind: output, shape index: {}]
  %s4 = sld [smem:[#allocation0]]
  $region22: #{ts_classification_forward.1} parent=0
    _
  %s6 = ssub.s32 1, %s4
  %s7 = scalar_select 0, %s6, %s4
  // Predicated region
  $region2: #{ts_classification_forward.1} parent=0 // pred_check
    _
  $region3: #{ts_classification_forward.1} parent=0 // pred_check_branch
    %9 = sbr.rel (0) target = $region5
  $region4: #{ts_classification_forward.1} parent=0 // pred_region
    _
  $region5: #{ts_classification_forward.1} parent=0 // pred_fallthru
    _
  // Predicated region
  $region6: #{ts_classification_forward.1} parent=0 // pred_check
    _
  $region7: #{ts_classification_forward.1} parent=0 // pred_check_branch
    %11 = sbr.rel (0) target = $region9
  $region8: #{ts_classification_forward.1} parent=0 // pred_region
    _
  $region9: #{ts_classification_forward.1} parent=0 // pred_fallthru
    _
  // Predicated region
  $region10: #{ts_classification_forward.1} parent=0 // pred_check
    _
  $region11: #{ts_classification_forward.1} parent=0 // pred_check_branch
    %13 = sbr.rel (0) target = $region13
  $region12: #{ts_classification_forward.1} parent=0 // pred_region
    _
  $region13: #{ts_classification_forward.1} parent=0 // pred_fallthru
    _
  %v14 = vld [vmem:[%s0] sm:$0xff]
  %v15 = vld [vmem:[%s0 + $0x8] sm:$0xff]
  %v16 = vld [vmem:[%s1] sm:$0xff]
  %s17 = scalar_lea.vmem %s1, 8
  %v18 = vld [vmem:[%s17] sm:$0xff]
  %v19 = vld [vmem:[%s2] sm:$0xff]
  %v20 = vld [vmem:[%s2 + $0x8] sm:$0xff]
  %v21 = vld [vmem:[%s2 + $0x10] sm:$0xff]
  %v22 = vld [vmem:[%s2 + $0x18] sm:$0xff]
  %v23 = vld [vmem:[%s2 + $0x20] sm:$0x1]
  %v24 = vld [vmem:[%s2 + $0x21] sm:$0x1]
  %v25 = vld [vmem:[%s2 + $0x22] sm:$0x1]
  %v26 = vld [vmem:[%s2 + $0x23] sm:$0x1]
  %v27 = vld [vmem:[%s2 + $0x24] sm:$0x1]
  %v28 = vld [vmem:[%s2 + $0x25] sm:$0x1]
  %v29 = vld [vmem:[%s2 + $0x26] sm:$0x1]
  %v30 = vld [vmem:[%s2 + $0x27] sm:$0x1]
  %v31 = vld [vmem:[%s2 + $0x28] sm:$0x1]
  %v32 = vld [vmem:[%s2 + $0x29] sm:$0x1]
  %v33 = vld [vmem:[%s2 + $0x2a] sm:$0x1]
  %v34 = vld [vmem:[%s2 + $0x2b] sm:$0x1]
  %v35 = vld [vmem:[%s2 + $0x2c] sm:$0x1]
  %v37 = vcombine.high %v18, %v18
  %v39 = vunpack.c.l.s4 1966171168
  %v40 = vunpack.c.0.s8 %v39
  %v41 = vlaneseq
  %v42 = vshrl.u32 %v41, 7
  %v43 = vsub.s32 %v40, %v42
  %v44 = vrot.slane %v18, %v43
  %v46 = vunpack.c.l.s4 1966171168
  %v47 = vunpack.c.0.s8 %v46
  %v48 = vlaneseq
  %v49 = vshrl.u32 %v48, 7
  %v50 = vsub.s32 %v47, %v49
  %v51 = vrot.slane %v37, %v50
  %v52 = vcombine.high %v44, %v44
  %v53 = vcombine.high %v51, %v51
  %v55 = vunpack.c.l.s4 1966171168
  %v56 = vunpack.c.0.s8 %v55
  %v57 = vlaneseq
  %v58 = vshrl.u32 %v57, 7
  %v59 = vsub.s32 %v56, %v58
  %v60 = vrot.slane %v44, %v59
  %v62 = vunpack.c.l.s4 1966171168
  %v63 = vunpack.c.0.s8 %v62
  %v64 = vlaneseq
  %v65 = vshrl.u32 %v64, 7
  %v66 = vsub.s32 %v63, %v65
  %v67 = vrot.slane %v51, %v66
  %v69 = vunpack.c.l.s4 1966171168
  %v70 = vunpack.c.0.s8 %v69
  %v71 = vlaneseq
  %v72 = vshrl.u32 %v71, 7
  %v73 = vsub.s32 %v70, %v72
  %v74 = vrot.slane %v52, %v73
  %v76 = vunpack.c.l.s4 1966171168
  %v77 = vunpack.c.0.s8 %v76
  %v78 = vlaneseq
  %v79 = vshrl.u32 %v78, 7
  %v80 = vsub.s32 %v77, %v79
  %v81 = vrot.slane %v53, %v80
  %v82 = vcombine.high %v60, %v60
  %v83 = vcombine.high %v67, %v67
  %v84 = vcombine.high %v74, %v74
  %v85 = vcombine.high %v81, %v81
  %vm94 = vcmp.ne.f32.partialorder %v60, 0.0
  %vm95 = vcmp.ne.f32.partialorder %v74, 0.0
  %vm96 = vcmp.ne.f32.partialorder %v82, 0.0
  %vm97 = vcmp.ne.f32.partialorder %v84, 0.0
  %vm98 = vcmp.ne.f32.partialorder %v67, 0.0
  %vm99 = vcmp.ne.f32.partialorder %v81, 0.0
  %vm100 = vcmp.ne.f32.partialorder %v83, 0.0
  %vm101 = vcmp.ne.f32.partialorder %v85, 0.0
  %v102 = vsel %vm94, 1, 0
  %v103 = vsel %vm95, 1, 0
  %v104 = vsel %vm96, 1, 0
  %v105 = vsel %vm97, 1, 0
  %v106 = vsel %vm98, 1, 0
  %v107 = vsel %vm99, 1, 0
  %v108 = vsel %vm100, 1, 0
  %v109 = vsel %vm101, 1, 0
  %v110 = vlaneseq
  %v111 = vshrl.u32 %v110, 7
  %v112 = vsub.s32 0, %v111
  %v113 = vrot.slane %v102, %v112
  %v114 = vlaneseq
  %v115 = vshrl.u32 %v114, 7
  %v116 = vsub.s32 0, %v115
  %v117 = vrot.slane %v103, %v116
  %v118 = vlaneseq
  %v119 = vshrl.u32 %v118, 7
  %v120 = vsub.s32 0, %v119
  %v121 = vrot.slane %v104, %v120
  %v122 = vlaneseq
  %v123 = vshrl.u32 %v122, 7
  %v124 = vsub.s32 0, %v123
  %v125 = vrot.slane %v105, %v124
  %v126 = vlaneseq
  %v127 = vshrl.u32 %v126, 7
  %v128 = vsub.s32 0, %v127
  %v129 = vrot.slane %v106, %v128
  %v130 = vlaneseq
  %v131 = vshrl.u32 %v130, 7
  %v132 = vsub.s32 0, %v131
  %v133 = vrot.slane %v107, %v132
  %v134 = vlaneseq
  %v135 = vshrl.u32 %v134, 7
  %v136 = vsub.s32 0, %v135
  %v137 = vrot.slane %v108, %v136
  %v138 = vlaneseq
  %v139 = vshrl.u32 %v138, 7
  %v140 = vsub.s32 0, %v139
  %v141 = vrot.slane %v109, %v140
  %vm142 = vcmp.eq.s32.totalorder %v113, 1
  %vm143 = vcmp.eq.s32.totalorder %v117, 1
  %vm144 = vcmp.eq.s32.totalorder %v121, 1
  %vm145 = vcmp.eq.s32.totalorder %v125, 1
  %vm146 = vcmp.eq.s32.totalorder %v129, 1
  %vm147 = vcmp.eq.s32.totalorder %v133, 1
  %vm148 = vcmp.eq.s32.totalorder %v137, 1
  %vm149 = vcmp.eq.s32.totalorder %v141, 1
  %v150 = vsel %vm142, %v14, -1e+09
  %v151 = vsel %vm143, %v14, -1e+09
  %v152 = vsel %vm144, %v14, -1e+09
  %v153 = vsel %vm145, %v14, -1e+09
  %v154 = vsel %vm146, %v15, -1e+09
  %v155 = vsel %vm147, %v15, -1e+09
  %v156 = vsel %vm148, %v15, -1e+09
  %v157 = vsel %vm149, %v15, -1e+09
  %vm158 = vcmask 64512
  %v159 = vsel %vm158, %v150, -inf
  %160 = vmax.xlane.f32.xlu0 %v159
  %v161 = vpop.xlane.xlu0 %160
  %v162 = vsel %vm158, %v151, -inf
  %163 = vmax.xlane.f32.xlu0 %v162
  %v164 = vpop.xlane.xlu0 %163
  %v165 = vsel %vm158, %v152, -inf
  %166 = vmax.xlane.f32.xlu0 %v165
  %v167 = vpop.xlane.xlu0 %166
  %v168 = vsel %vm158, %v153, -inf
  %169 = vmax.xlane.f32.xlu0 %v168
  %v170 = vpop.xlane.xlu0 %169
  %v171 = vsel %vm158, %v154, -inf
  %172 = vmax.xlane.f32.xlu0 %v171
  %v173 = vpop.xlane.xlu0 %172
  %v174 = vsel %vm158, %v155, -inf
  %175 = vmax.xlane.f32.xlu0 %v174
  %v176 = vpop.xlane.xlu0 %175
  %v177 = vsel %vm158, %v156, -inf
  %178 = vmax.xlane.f32.xlu0 %v177
  %v179 = vpop.xlane.xlu0 %178
  %v180 = vsel %vm158, %v157, -inf
  %181 = vmax.xlane.f32.xlu0 %v180
  %v182 = vpop.xlane.xlu0 %181
  %v183 = vsub.f32 %v150, %v161
  %v184 = vsub.f32 %v151, %v164
  %v185 = vsub.f32 %v152, %v167
  %v186 = vsub.f32 %v153, %v170
  %v187 = vsub.f32 %v154, %v173
  %v188 = vsub.f32 %v155, %v176
  %v189 = vsub.f32 %v156, %v179
  %v190 = vsub.f32 %v157, %v182
  %v191 = vmul.f32 %v183, 1.442695
  %v192 = vpow.pop %v191
  %v193 = vmul.f32 %v184, 1.442695
  %v194 = vpow.pop %v193
  %v195 = vmul.f32 %v185, 1.442695
  %v196 = vpow.pop %v195
  %v197 = vmul.f32 %v186, 1.442695
  %v198 = vpow.pop %v197
  %v199 = vmul.f32 %v187, 1.442695
  %v200 = vpow.pop %v199
  %v201 = vmul.f32 %v188, 1.442695
  %v202 = vpow.pop %v201
  %v203 = vmul.f32 %v189, 1.442695
  %v204 = vpow.pop %v203
  %v205 = vmul.f32 %v190, 1.442695
  %v206 = vpow.pop %v205
  %v207 = vsel %vm158, %v192, 0.0
  %208 = vadd.xlane.f32.xlu0 %v207
  %v209 = vpop.xlane.xlu0 %208
  %v210 = vsel %vm158, %v194, 0.0
  %211 = vadd.xlane.f32.xlu0 %v210
  %v212 = vpop.xlane.xlu0 %211
  %v213 = vsel %vm158, %v196, 0.0
  %214 = vadd.xlane.f32.xlu0 %v213
  %v215 = vpop.xlane.xlu0 %214
  %v216 = vsel %vm158, %v198, 0.0
  %217 = vadd.xlane.f32.xlu0 %v216
  %v218 = vpop.xlane.xlu0 %217
  %v219 = vsel %vm158, %v200, 0.0
  %220 = vadd.xlane.f32.xlu0 %v219
  %v221 = vpop.xlane.xlu0 %220
  %v222 = vsel %vm158, %v202, 0.0
  %223 = vadd.xlane.f32.xlu0 %v222
  %v224 = vpop.xlane.xlu0 %223
  %v225 = vsel %vm158, %v204, 0.0
  %226 = vadd.xlane.f32.xlu0 %v225
  %v227 = vpop.xlane.xlu0 %226
  %v228 = vsel %vm158, %v206, 0.0
  %229 = vadd.xlane.f32.xlu0 %v228
  %v230 = vpop.xlane.xlu0 %229
  %v231 = vrcp.pop %v209
  %v232 = vrcp.pop %v212
  %v233 = vrcp.pop %v215
  %v234 = vrcp.pop %v218
  %v235 = vrcp.pop %v221
  %v236 = vrcp.pop %v224
  %v237 = vrcp.pop %v227
  %v238 = vrcp.pop %v230
  %v239 = vmul.f32 %v192, %v231
  %v240 = vmul.f32 %v194, %v232
  %v241 = vmul.f32 %v196, %v233
  %v242 = vmul.f32 %v198, %v234
  %v243 = vmul.f32 %v200, %v235
  %v244 = vmul.f32 %v202, %v236
  %v245 = vmul.f32 %v204, %v237
  %v246 = vmul.f32 %v206, %v238
  %v248 = vcombine.high %v16, %v16
  %v250 = vunpack.c.l.s4 1966171168
  %v251 = vunpack.c.0.s8 %v250
  %v252 = vlaneseq
  %v253 = vshrl.u32 %v252, 7
  %v254 = vsub.s32 %v251, %v253
  %v255 = vrot.slane %v16, %v254
  %v257 = vunpack.c.l.s4 1966171168
  %v258 = vunpack.c.0.s8 %v257
  %v259 = vlaneseq
  %v260 = vshrl.u32 %v259, 7
  %v261 = vsub.s32 %v258, %v260
  %v262 = vrot.slane %v248, %v261
  %v263 = vcombine.high %v255, %v255
  %v264 = vcombine.high %v262, %v262
  %v266 = vunpack.c.l.s4 1966171168
  %v267 = vunpack.c.0.s8 %v266
  %v268 = vlaneseq
  %v269 = vshrl.u32 %v268, 7
  %v270 = vsub.s32 %v267, %v269
  %v271 = vrot.slane %v255, %v270
  %v273 = vunpack.c.l.s4 1966171168
  %v274 = vunpack.c.0.s8 %v273
  %v275 = vlaneseq
  %v276 = vshrl.u32 %v275, 7
  %v277 = vsub.s32 %v274, %v276
  %v278 = vrot.slane %v262, %v277
  %v280 = vunpack.c.l.s4 1966171168
  %v281 = vunpack.c.0.s8 %v280
  %v282 = vlaneseq
  %v283 = vshrl.u32 %v282, 7
  %v284 = vsub.s32 %v281, %v283
  %v285 = vrot.slane %v263, %v284
  %v287 = vunpack.c.l.s4 1966171168
  %v288 = vunpack.c.0.s8 %v287
  %v289 = vlaneseq
  %v290 = vshrl.u32 %v289, 7
  %v291 = vsub.s32 %v288, %v290
  %v292 = vrot.slane %v264, %v291
  %v293 = vcombine.high %v271, %v271
  %v294 = vcombine.high %v278, %v278
  %v295 = vcombine.high %v285, %v285
  %v296 = vcombine.high %v292, %v292
  %v297 = vlaneseq
  %v298 = vshrl.u32 %v297, 7
  %v299 = vsub.s32 0, %v298
  %v300 = vrot.slane %v271, %v299
  %v301 = vlaneseq
  %v302 = vshrl.u32 %v301, 7
  %v303 = vsub.s32 0, %v302
  %v304 = vrot.slane %v285, %v303
  %v305 = vlaneseq
  %v306 = vshrl.u32 %v305, 7
  %v307 = vsub.s32 0, %v306
  %v308 = vrot.slane %v293, %v307
  %v309 = vlaneseq
  %v310 = vshrl.u32 %v309, 7
  %v311 = vsub.s32 0, %v310
  %v312 = vrot.slane %v295, %v311
  %v313 = vlaneseq
  %v314 = vshrl.u32 %v313, 7
  %v315 = vsub.s32 0, %v314
  %v316 = vrot.slane %v278, %v315
  %v317 = vlaneseq
  %v318 = vshrl.u32 %v317, 7
  %v319 = vsub.s32 0, %v318
  %v320 = vrot.slane %v292, %v319
  %v321 = vlaneseq
  %v322 = vshrl.u32 %v321, 7
  %v323 = vsub.s32 0, %v322
  %v324 = vrot.slane %v294, %v323
  %v325 = vlaneseq
  %v326 = vshrl.u32 %v325, 7
  %v327 = vsub.s32 0, %v326
  %v328 = vrot.slane %v296, %v327
  %v337 = vmul.f32 %v239, %v300
  %v338 = vmul.f32 %v240, %v304
  %v339 = vmul.f32 %v241, %v308
  %v340 = vmul.f32 %v242, %v312
  %v341 = vmul.f32 %v243, %v316
  %v342 = vmul.f32 %v244, %v320
  %v343 = vmul.f32 %v245, %v324
  %v344 = vmul.f32 %v246, %v328
  %v345 = vsel %vm158, %v337, 0.0
  %346 = vadd.xlane.f32.xlu0 %v345
  %v347 = vpop.xlane.xlu0 %346
  %v348 = vsel %vm158, %v338, 0.0
  %349 = vadd.xlane.f32.xlu0 %v348
  %v350 = vpop.xlane.xlu0 %349
  %v351 = vsel %vm158, %v339, 0.0
  %352 = vadd.xlane.f32.xlu0 %v351
  %v353 = vpop.xlane.xlu0 %352
  %v354 = vsel %vm158, %v340, 0.0
  %355 = vadd.xlane.f32.xlu0 %v354
  %v356 = vpop.xlane.xlu0 %355
  %v357 = vsel %vm158, %v341, 0.0
  %358 = vadd.xlane.f32.xlu0 %v357
  %v359 = vpop.xlane.xlu0 %358
  %v360 = vsel %vm158, %v342, 0.0
  %361 = vadd.xlane.f32.xlu0 %v360
  %v362 = vpop.xlane.xlu0 %361
  %v363 = vsel %vm158, %v343, 0.0
  %364 = vadd.xlane.f32.xlu0 %v363
  %v365 = vpop.xlane.xlu0 %364
  %v366 = vsel %vm158, %v344, 0.0
  %367 = vadd.xlane.f32.xlu0 %v366
  %v368 = vpop.xlane.xlu0 %367
  %s370 = vtos %v35
  %v371 = vstv %s370
  %v373 = vmul.f32 %v347, %v371
  %v374 = vmul.f32 %v350, %v371
  %v375 = vmul.f32 %v353, %v371
  %v376 = vmul.f32 %v356, %v371
  %v377 = vmul.f32 %v359, %v371
  %v378 = vmul.f32 %v362, %v371
  %v379 = vmul.f32 %v365, %v371
  %v380 = vmul.f32 %v368, %v371
  %381 = vrot.lane.b32.xlu0 %v35, 127
  %v382 = vpop.permute.xlu0 %381
  %s383 = vtos %v382
  %v384 = vstv %s383
  %v386 = vadd.f32 %v373, %v384
  %v387 = vadd.f32 %v374, %v384
  %v388 = vadd.f32 %v375, %v384
  %v389 = vadd.f32 %v376, %v384
  %v390 = vadd.f32 %v377, %v384
  %v391 = vadd.f32 %v378, %v384
  %v392 = vadd.f32 %v379, %v384
  %v393 = vadd.f32 %v380, %v384
  %v402 = vlaneseq
  %v403 = vand.u32 %v402, 127
  %v404 = vlaneseq
  %v405 = vshrl.u32 %v404, 7
  %v406 = vsub.s32 %v403, %v405
  %v407 = vrot.slane %v386, %v406
  %v408 = vlaneseq
  %v409 = vshrl.u32 %v408, 7
  %v410 = vsub.s32 %v403, %v409
  %v411 = vrot.slane %v387, %v410
  %v412 = vlaneseq
  %v413 = vshrl.u32 %v412, 7
  %v414 = vsub.s32 %v403, %v413
  %v415 = vrot.slane %v388, %v414
  %v416 = vlaneseq
  %v417 = vshrl.u32 %v416, 7
  %v418 = vsub.s32 %v403, %v417
  %v419 = vrot.slane %v389, %v418
  %v420 = vlaneseq
  %v421 = vshrl.u32 %v420, 7
  %v422 = vsub.s32 %v403, %v421
  %v423 = vrot.slane %v390, %v422
  %v424 = vlaneseq
  %v425 = vshrl.u32 %v424, 7
  %v426 = vsub.s32 %v403, %v425
  %v427 = vrot.slane %v391, %v426
  %v428 = vlaneseq
  %v429 = vshrl.u32 %v428, 7
  %v430 = vsub.s32 %v403, %v429
  %v431 = vrot.slane %v392, %v430
  %v432 = vlaneseq
  %v433 = vshrl.u32 %v432, 7
  %v434 = vsub.s32 %v403, %v433
  %v435 = vrot.slane %v393, %v434
  %vm436 = vcmask 1041409
  %v437 = vsel %vm436, %v411, %v407
  %vm438 = vcmask 1042434
  %v439 = vsel %vm438, %v415, %v437
  %vm440 = vcmask 1043459
  %v441 = vsel %vm440, %v419, %v439
  %vm442 = vcmask 1044484
  %v443 = vsel %vm442, %v423, %v441
  %vm444 = vcmask 1045509
  %v445 = vsel %vm444, %v427, %v443
  %vm446 = vcmask 1046534
  %v447 = vsel %vm446, %v431, %v445
  %vm448 = vcmask 1047559
  %v449 = vsel %vm448, %v435, %v447
  %v451 = vsel %vm158, %v449, -inf
  %452 = vmax.xlane.f32.xlu0 %v451
  %v453 = vpop.xlane.xlu0 %452
  %v455 = vlaneseq
  %v456 = vshrl.u32 %v455, 7
  %v457 = vsub.s32 0, %v456
  %v458 = vrot.slane %v453, %v457
  %v459 = vlaneseq
  %v460 = vshrl.u32 %v459, 7
  %v461 = vsub.s32 1, %v460
  %v462 = vrot.slane %v453, %v461
  %v463 = vlaneseq
  %v464 = vshrl.u32 %v463, 7
  %v465 = vsub.s32 2, %v464
  %v466 = vrot.slane %v453, %v465
  %v467 = vlaneseq
  %v468 = vshrl.u32 %v467, 7
  %v469 = vsub.s32 3, %v468
  %v470 = vrot.slane %v453, %v469
  %v471 = vlaneseq
  %v472 = vshrl.u32 %v471, 7
  %v473 = vsub.s32 4, %v472
  %v474 = vrot.slane %v453, %v473
  %v475 = vlaneseq
  %v476 = vshrl.u32 %v475, 7
  %v477 = vsub.s32 5, %v476
  %v478 = vrot.slane %v453, %v477
  %v479 = vlaneseq
  %v480 = vshrl.u32 %v479, 7
  %v481 = vsub.s32 6, %v480
  %v482 = vrot.slane %v453, %v481
  %v483 = vlaneseq
  %v484 = vshrl.u32 %v483, 7
  %v485 = vsub.s32 7, %v484
  %v486 = vrot.slane %v453, %v485
  %v495 = vsub.f32 %v386, %v458
  %v496 = vsub.f32 %v387, %v462
  %v497 = vsub.f32 %v388, %v466
  %v498 = vsub.f32 %v389, %v470
  %v499 = vsub.f32 %v390, %v474
  %v500 = vsub.f32 %v391, %v478
  %v501 = vsub.f32 %v392, %v482
  %v502 = vsub.f32 %v393, %v486
  %v503 = vmul.f32 %v495, 1.442695
  %v504 = vpow.pop %v503
  %v505 = vmul.f32 %v496, 1.442695
  %v506 = vpow.pop %v505
  %v507 = vmul.f32 %v497, 1.442695
  %v508 = vpow.pop %v507
  %v509 = vmul.f32 %v498, 1.442695
  %v510 = vpow.pop %v509
  %v511 = vmul.f32 %v499, 1.442695
  %v512 = vpow.pop %v511
  %v513 = vmul.f32 %v500, 1.442695
  %v514 = vpow.pop %v513
  %v515 = vmul.f32 %v501, 1.442695
  %v516 = vpow.pop %v515
  %v517 = vmul.f32 %v502, 1.442695
  %v518 = vpow.pop %v517
  %527 = vset.pattern.permute.xlu0 0
  %528 = vperm.xlu0 %527, %v504
  %v529 = vpop.permute.xlu0 %528
  %530 = vset.pattern.permute.xlu0 0
  %531 = vperm.xlu0 %530, %v506
  %v532 = vpop.permute.xlu0 %531
  %533 = vset.pattern.permute.xlu0 0
  %534 = vperm.xlu0 %533, %v508
  %v535 = vpop.permute.xlu0 %534
  %536 = vset.pattern.permute.xlu0 0
  %537 = vperm.xlu0 %536, %v510
  %v538 = vpop.permute.xlu0 %537
  %539 = vset.pattern.permute.xlu0 0
  %540 = vperm.xlu0 %539, %v512
  %v541 = vpop.permute.xlu0 %540
  %542 = vset.pattern.permute.xlu0 0
  %543 = vperm.xlu0 %542, %v514
  %v544 = vpop.permute.xlu0 %543
  %545 = vset.pattern.permute.xlu0 0
  %546 = vperm.xlu0 %545, %v516
  %v547 = vpop.permute.xlu0 %546
  %548 = vset.pattern.permute.xlu0 0
  %549 = vperm.xlu0 %548, %v518
  %v550 = vpop.permute.xlu0 %549
  %v551 = vlaneseq
  %v552 = vshrl.u32 %v551, 7
  %v553 = vsub.s32 %v403, %v552
  %v554 = vrot.slane %v529, %v553
  %v555 = vlaneseq
  %v556 = vshrl.u32 %v555, 7
  %v557 = vsub.s32 %v403, %v556
  %v558 = vrot.slane %v532, %v557
  %v559 = vlaneseq
  %v560 = vshrl.u32 %v559, 7
  %v561 = vsub.s32 %v403, %v560
  %v562 = vrot.slane %v535, %v561
  %v563 = vlaneseq
  %v564 = vshrl.u32 %v563, 7
  %v565 = vsub.s32 %v403, %v564
  %v566 = vrot.slane %v538, %v565
  %v567 = vlaneseq
  %v568 = vshrl.u32 %v567, 7
  %v569 = vsub.s32 %v403, %v568
  %v570 = vrot.slane %v541, %v569
  %v571 = vlaneseq
  %v572 = vshrl.u32 %v571, 7
  %v573 = vsub.s32 %v403, %v572
  %v574 = vrot.slane %v544, %v573
  %v575 = vlaneseq
  %v576 = vshrl.u32 %v575, 7
  %v577 = vsub.s32 %v403, %v576
  %v578 = vrot.slane %v547, %v577
  %v579 = vlaneseq
  %v580 = vshrl.u32 %v579, 7
  %v581 = vsub.s32 %v403, %v580
  %v582 = vrot.slane %v550, %v581
  %v583 = vsel %vm436, %v558, %v554
  %v584 = vsel %vm438, %v562, %v583
  %v585 = vsel %vm440, %v566, %v584
  %v586 = vsel %vm442, %v570, %v585
  %v587 = vsel %vm444, %v574, %v586
  %v588 = vsel %vm446, %v578, %v587
  %v589 = vsel %vm448, %v582, %v588
  %v591 = vsel %vm158, %v589, 0.0
  %592 = vadd.xlane.f32.xlu0 %v591
  %v593 = vpop.xlane.xlu0 %592
  %v595 = vlaneseq
  %v596 = vshrl.u32 %v595, 7
  %v597 = vsub.s32 0, %v596
  %v598 = vrot.slane %v593, %v597
  %v599 = vlaneseq
  %v600 = vshrl.u32 %v599, 7
  %v601 = vsub.s32 1, %v600
  %v602 = vrot.slane %v593, %v601
  %v603 = vlaneseq
  %v604 = vshrl.u32 %v603, 7
  %v605 = vsub.s32 2, %v604
  %v606 = vrot.slane %v593, %v605
  %v607 = vlaneseq
  %v608 = vshrl.u32 %v607, 7
  %v609 = vsub.s32 3, %v608
  %v610 = vrot.slane %v593, %v609
  %v611 = vlaneseq
  %v612 = vshrl.u32 %v611, 7
  %v613 = vsub.s32 4, %v612
  %v614 = vrot.slane %v593, %v613
  %v615 = vlaneseq
  %v616 = vshrl.u32 %v615, 7
  %v617 = vsub.s32 5, %v616
  %v618 = vrot.slane %v593, %v617
  %v619 = vlaneseq
  %v620 = vshrl.u32 %v619, 7
  %v621 = vsub.s32 6, %v620
  %v622 = vrot.slane %v593, %v621
  %v623 = vlaneseq
  %v624 = vshrl.u32 %v623, 7
  %v625 = vsub.s32 7, %v624
  %v626 = vrot.slane %v593, %v625
  %v635 = vrcp.pop %v598
  %v636 = vmul.f32 %v504, %v635
  %v637 = vrcp.pop %v602
  %v638 = vmul.f32 %v506, %v637
  %v639 = vrcp.pop %v606
  %v640 = vmul.f32 %v508, %v639
  %v641 = vrcp.pop %v610
  %v642 = vmul.f32 %v510, %v641
  %v643 = vrcp.pop %v614
  %v644 = vmul.f32 %v512, %v643
  %v645 = vrcp.pop %v618
  %v646 = vmul.f32 %v514, %v645
  %v647 = vrcp.pop %v622
  %v648 = vmul.f32 %v516, %v647
  %v649 = vrcp.pop %v626
  %v650 = vmul.f32 %v518, %v649
  %v651 = vmul.f32 %v636, %v347
  %v652 = vmul.f32 %v638, %v350
  %v653 = vmul.f32 %v640, %v353
  %v654 = vmul.f32 %v642, %v356
  %v655 = vmul.f32 %v644, %v359
  %v656 = vmul.f32 %v646, %v362
  %v657 = vmul.f32 %v648, %v365
  %v658 = vmul.f32 %v650, %v368
  %667 = vset.pattern.permute.xlu0 0
  %668 = vperm.xlu0 %667, %v651
  %v669 = vpop.permute.xlu0 %668
  %670 = vset.pattern.permute.xlu0 0
  %671 = vperm.xlu0 %670, %v652
  %v672 = vpop.permute.xlu0 %671
  %673 = vset.pattern.permute.xlu0 0
  %674 = vperm.xlu0 %673, %v653
  %v675 = vpop.permute.xlu0 %674
  %676 = vset.pattern.permute.xlu0 0
  %677 = vperm.xlu0 %676, %v654
  %v678 = vpop.permute.xlu0 %677
  %679 = vset.pattern.permute.xlu0 0
  %680 = vperm.xlu0 %679, %v655
  %v681 = vpop.permute.xlu0 %680
  %682 = vset.pattern.permute.xlu0 0
  %683 = vperm.xlu0 %682, %v656
  %v684 = vpop.permute.xlu0 %683
  %685 = vset.pattern.permute.xlu0 0
  %686 = vperm.xlu0 %685, %v657
  %v687 = vpop.permute.xlu0 %686
  %688 = vset.pattern.permute.xlu0 0
  %689 = vperm.xlu0 %688, %v658
  %v690 = vpop.permute.xlu0 %689
  %v691 = vlaneseq
  %v692 = vshrl.u32 %v691, 7
  %v693 = vsub.s32 %v403, %v692
  %v694 = vrot.slane %v669, %v693
  %v695 = vlaneseq
  %v696 = vshrl.u32 %v695, 7
  %v697 = vsub.s32 %v403, %v696
  %v698 = vrot.slane %v672, %v697
  %v699 = vlaneseq
  %v700 = vshrl.u32 %v699, 7
  %v701 = vsub.s32 %v403, %v700
  %v702 = vrot.slane %v675, %v701
  %v703 = vlaneseq
  %v704 = vshrl.u32 %v703, 7
  %v705 = vsub.s32 %v403, %v704
  %v706 = vrot.slane %v678, %v705
  %v707 = vlaneseq
  %v708 = vshrl.u32 %v707, 7
  %v709 = vsub.s32 %v403, %v708
  %v710 = vrot.slane %v681, %v709
  %v711 = vlaneseq
  %v712 = vshrl.u32 %v711, 7
  %v713 = vsub.s32 %v403, %v712
  %v714 = vrot.slane %v684, %v713
  %v715 = vlaneseq
  %v716 = vshrl.u32 %v715, 7
  %v717 = vsub.s32 %v403, %v716
  %v718 = vrot.slane %v687, %v717
  %v719 = vlaneseq
  %v720 = vshrl.u32 %v719, 7
  %v721 = vsub.s32 %v403, %v720
  %v722 = vrot.slane %v690, %v721
  %v723 = vsel %vm436, %v698, %v694
  %v724 = vsel %vm438, %v702, %v723
  %v725 = vsel %vm440, %v706, %v724
  %v726 = vsel %vm442, %v710, %v725
  %v727 = vsel %vm444, %v714, %v726
  %v728 = vsel %vm446, %v718, %v727
  %v729 = vsel %vm448, %v722, %v728
  %v731 = vsel %vm158, %v729, 0.0
  %732 = vadd.xlane.f32.xlu0 %v731
  %v733 = vpop.xlane.xlu0 %732
  %742 = vset.pattern.permute.xlu0 0
  %743 = vperm.xlu0 %742, %v636
  %v744 = vpop.permute.xlu0 %743
  %745 = vset.pattern.permute.xlu0 0
  %746 = vperm.xlu0 %745, %v638
  %v747 = vpop.permute.xlu0 %746
  %748 = vset.pattern.permute.xlu0 0
  %749 = vperm.xlu0 %748, %v640
  %v750 = vpop.permute.xlu0 %749
  %751 = vset.pattern.permute.xlu0 0
  %752 = vperm.xlu0 %751, %v642
  %v753 = vpop.permute.xlu0 %752
  %754 = vset.pattern.permute.xlu0 0
  %755 = vperm.xlu0 %754, %v644
  %v756 = vpop.permute.xlu0 %755
  %757 = vset.pattern.permute.xlu0 0
  %758 = vperm.xlu0 %757, %v646
  %v759 = vpop.permute.xlu0 %758
  %760 = vset.pattern.permute.xlu0 0
  %761 = vperm.xlu0 %760, %v648
  %v762 = vpop.permute.xlu0 %761
  %763 = vset.pattern.permute.xlu0 0
  %764 = vperm.xlu0 %763, %v650
  %v765 = vpop.permute.xlu0 %764
  %v766 = vlaneseq
  %v767 = vshrl.u32 %v766, 7
  %v768 = vsub.s32 %v403, %v767
  %v769 = vrot.slane %v744, %v768
  %v770 = vlaneseq
  %v771 = vshrl.u32 %v770, 7
  %v772 = vsub.s32 %v403, %v771
  %v773 = vrot.slane %v747, %v772
  %v774 = vlaneseq
  %v775 = vshrl.u32 %v774, 7
  %v776 = vsub.s32 %v403, %v775
  %v777 = vrot.slane %v750, %v776
  %v778 = vlaneseq
  %v779 = vshrl.u32 %v778, 7
  %v780 = vsub.s32 %v403, %v779
  %v781 = vrot.slane %v753, %v780
  %v782 = vlaneseq
  %v783 = vshrl.u32 %v782, 7
  %v784 = vsub.s32 %v403, %v783
  %v785 = vrot.slane %v756, %v784
  %v786 = vlaneseq
  %v787 = vshrl.u32 %v786, 7
  %v788 = vsub.s32 %v403, %v787
  %v789 = vrot.slane %v759, %v788
  %v790 = vlaneseq
  %v791 = vshrl.u32 %v790, 7
  %v792 = vsub.s32 %v403, %v791
  %v793 = vrot.slane %v762, %v792
  %v794 = vlaneseq
  %v795 = vshrl.u32 %v794, 7
  %v796 = vsub.s32 %v403, %v795
  %v797 = vrot.slane %v765, %v796
  %v798 = vsel %vm436, %v773, %v769
  %v799 = vsel %vm438, %v777, %v798
  %v800 = vsel %vm440, %v781, %v799
  %v801 = vsel %vm442, %v785, %v800
  %v802 = vsel %vm444, %v789, %v801
  %v803 = vsel %vm446, %v793, %v802
  %v804 = vsel %vm448, %v797, %v803
  %v806 = vsel %vm158, %v804, 0.0
  %807 = vadd.xlane.f32.xlu0 %v806
  %v808 = vpop.xlane.xlu0 %807
  %v809 = vlaneseq
  %v810 = vshrl.u32 %v809, 7
  %v811 = vsub.s32 0, %v810
  %v812 = vrot.slane %v23, %v811
  %v813 = vmul.f32 %v733, %v812
  %v814 = vlaneseq
  %v815 = vshrl.u32 %v814, 7
  %v816 = vsub.s32 0, %v815
  %v817 = vrot.slane %v24, %v816
  %v818 = vmul.f32 %v808, %v817
  %v819 = vadd.f32 %v813, %v818
  %v820 = vlaneseq
  %v821 = vshrl.u32 %v820, 7
  %v822 = vsub.s32 0, %v821
  %v823 = vrot.slane %v26, %v822
  %vm824 = vcmask 261120
  %v826 = vsel %vm824, %v819, 0
  %828 = vmatprep.subr.mxu0 0.0
  %829 = vmatpush1.msra.mxu0 0.0
  %830 = vmatprep.subr.mxu0 0.0
  %831 = vmatpush1.msra.mxu0 0.0
  %832 = vmatprep.subr.mxu0 0.0
  %833 = vmatpush1.msra.mxu0 0.0
  %834 = vmatprep.subr.mxu0 0.0
  %835 = vmatpush1.msra.mxu0 0.0
  %836 = vmatprep.subr.mxu0 0.0
  %837 = vmatpush1.msra.mxu0 0.0
  %838 = vmatprep.subr.mxu0 0.0
  %839 = vmatpush1.msra.mxu0 0.0
  %840 = vmatprep.subr.mxu0 0.0
  %841 = vmatpush1.msra.mxu0 0.0
  %842 = vmatprep.subr.mxu0 0.0
  %843 = vmatpush1.msra.mxu0 0.0
  %844 = vmatprep.subr.mxu0 0.0
  %845 = vmatpush1.msra.mxu0 0.0
  %846 = vmatprep.subr.mxu0 0.0
  %847 = vmatpush1.msra.mxu0 0.0
  %848 = vmatprep.subr.mxu0 0.0
  %849 = vmatpush1.msra.mxu0 0.0
  %850 = vmatprep.subr.mxu0 0.0
  %851 = vmatpush1.msra.mxu0 0.0
  %852 = vmatprep.subr.mxu0 0.0
  %853 = vmatpush1.msra.mxu0 %v22
  %854 = vmatprep.subr.mxu0 0.0
  %855 = vmatpush1.msra.mxu0 %v21
  %856 = vmatprep.subr.mxu0 0.0
  %857 = vmatpush1.msra.mxu0 %v20
  %858 = vmatprep.subr.mxu0 0.0
  %859 = vmatpush1.msra.mxu0 %v19
  %860 = vmatprep.subr.mxu0 0.0
  %861 = vmatpush2.msra.mxu0 0.0
  %862 = vmatprep.subr.mxu0 0.0
  %863 = vmatpush2.msra.mxu0 0.0
  %864 = vmatprep.subr.mxu0 0.0
  %865 = vmatpush2.msra.mxu0 0.0
  %866 = vmatprep.subr.mxu0 0.0
  %867 = vmatpush2.msra.mxu0 0.0
  %868 = vmatprep.subr.mxu0 0.0
  %869 = vmatpush2.msra.mxu0 0.0
  %870 = vmatprep.subr.mxu0 0.0
  %871 = vmatpush2.msra.mxu0 0.0
  %872 = vmatprep.subr.mxu0 0.0
  %873 = vmatpush2.msra.mxu0 0.0
  %874 = vmatprep.subr.mxu0 0.0
  %875 = vmatpush2.msra.mxu0 0.0
  %876 = vmatprep.subr.mxu0 0.0
  %877 = vmatpush2.msra.mxu0 0.0
  %878 = vmatprep.subr.mxu0 0.0
  %879 = vmatpush2.msra.mxu0 0.0
  %880 = vmatprep.subr.mxu0 0.0
  %881 = vmatpush2.msra.mxu0 0.0
  %882 = vmatprep.subr.mxu0 0.0
  %883 = vmatpush2.msra.mxu0 0.0
  %884 = vmatprep.subr.mxu0 0.0
  %885 = vmatpush2.msra.mxu0 0.0
  %886 = vmatprep.subr.mxu0 0.0
  %887 = vmatpush2.msra.mxu0 0.0
  %888 = vmatprep.subr.mxu0 0.0
  %889 = vmatpush2.msra.mxu0 0.0
  %890 = vmatprep.subr.mxu0 0.0
  %891 = vmatpush2.msra.mxu0 0.0
  %892 = vmatprep.mubr.f32.mxu0 0.0
  %893 = vmatmul.mubr.f32.gmra.mxu0 %v826
  %v894 = vpop.f32.mrf.mxu0
  %v895 = vadd.f32 %v823, %v894
  %v896 = vpop.f32.mrf.mxu0
  %897 = vdwg.mxu0
  %v898 = vmul.f32 %v895, 0.5
  %v899 = vmul.f32 %v895, 0.044715
  %v900 = vmul.f32 %v899, %v895
  %v901 = vmul.f32 %v900, %v895
  %v902 = vadd.f32 %v895, %v901
  %v903 = vmul.f32 %v902, 0.7978846
  %v904 = vtanh.pop %v903
  %v905 = vadd.f32 %v904, 1.0
  %v906 = vmul.f32 %v898, %v905
  %v908 = vcombine.high %v906, %v906
  %v910 = vlaneseq
  %v911 = vshrl.u32 %v910, 7
  %v912 = vsub.s32 0, %v911
  %v913 = vrot.slane %v25, %v912
  %v914 = vmul.f32 %v906, %v913
  %v915 = vmul.f32 %v908, %v913
  %vm916 = vcmask 125952
  %v917 = vsel %vm916, %v914, 0.0
  %918 = vadd.xlane.f32.xlu0 %v917
  %v919 = vpop.xlane.xlu0 %918
  %v920 = vsel %vm916, %v915, 0.0
  %921 = vadd.xlane.f32.xlu0 %v920
  %v922 = vpop.xlane.xlu0 %921
  %s924 = vtos %v27
  %v925 = vstv %s924
  %v927 = vadd.f32 %v919, %v925
  %v928 = vadd.f32 %v922, %v925
  %v931 = vlaneseq
  %v932 = vshrl.u32 %v931, 7
  %v933 = vsub.s32 %v403, %v932
  %v934 = vrot.slane %v927, %v933
  %v935 = vlaneseq
  %v936 = vshrl.u32 %v935, 7
  %v937 = vsub.s32 %v403, %v936
  %v938 = vrot.slane %v928, %v937
  %v939 = vsel %vm436, %v938, %v934
  %vm941 = vcmask 25600
  %v942 = vsel %vm941, %v939, -inf
  %943 = vmax.xlane.f32.xlu0 %v942
  %v944 = vpop.xlane.xlu0 %943
  %v946 = vlaneseq
  %v947 = vshrl.u32 %v946, 7
  %v948 = vsub.s32 0, %v947
  %v949 = vrot.slane %v944, %v948
  %v950 = vlaneseq
  %v951 = vshrl.u32 %v950, 7
  %v952 = vsub.s32 1, %v951
  %v953 = vrot.slane %v944, %v952
  %v956 = vsub.f32 %v927, %v949
  %v957 = vsub.f32 %v928, %v953
  %v958 = vmul.f32 %v956, 1.442695
  %v959 = vpow.pop %v958
  %v960 = vmul.f32 %v957, 1.442695
  %v961 = vpow.pop %v960
  %964 = vset.pattern.permute.xlu0 0
  %965 = vperm.xlu0 %964, %v959
  %v966 = vpop.permute.xlu0 %965
  %967 = vset.pattern.permute.xlu0 0
  %968 = vperm.xlu0 %967, %v961
  %v969 = vpop.permute.xlu0 %968
  %v970 = vlaneseq
  %v971 = vshrl.u32 %v970, 7
  %v972 = vsub.s32 %v403, %v971
  %v973 = vrot.slane %v966, %v972
  %v974 = vlaneseq
  %v975 = vshrl.u32 %v974, 7
  %v976 = vsub.s32 %v403, %v975
  %v977 = vrot.slane %v969, %v976
  %v978 = vsel %vm436, %v977, %v973
  %v980 = vsel %vm941, %v978, 0.0
  %981 = vadd.xlane.f32.xlu0 %v980
  %v982 = vpop.xlane.xlu0 %981
  %v984 = vlaneseq
  %v985 = vshrl.u32 %v984, 7
  %v986 = vsub.s32 0, %v985
  %v987 = vrot.slane %v982, %v986
  %v988 = vlaneseq
  %v989 = vshrl.u32 %v988, 7
  %v990 = vsub.s32 1, %v989
  %v991 = vrot.slane %v982, %v990
  %v994 = vrcp.pop %v987
  %v995 = vmul.f32 %v959, %v994
  %v996 = vrcp.pop %v991
  %v997 = vmul.f32 %v961, %v996
  %v998 = vcombine.high %v819, %v819
  %1001 = vset.pattern.permute.xlu0 0
  %1002 = vperm.xlu0 %1001, %v995
  %v1003 = vpop.permute.xlu0 %1002
  %1006 = vset.pattern.permute.xlu0 0
  %1007 = vperm.xlu0 %1006, %v997
  %v1008 = vpop.permute.xlu0 %1007
  %v1010 = vmul.f32 %v1003, %v819
  %v1011 = vmul.f32 %v1008, %v998
  %vm1012 = vcmask 257024
  %v1013 = vsel %vm1012, %v1010, 0.0
  %v1014 = vrot.slane %v1013, 4
  %v1015 = vadd.f32 %v1013, %v1014
  %v1016 = vrot.slane %v1015, 2
  %v1017 = vadd.f32 %v1015, %v1016
  %v1018 = vrot.slane %v1017, 1
  %v1019 = vadd.f32 %v1017, %v1018
  %v1020 = vsel %vm1012, %v1011, 0.0
  %v1021 = vrot.slane %v1020, 4
  %v1022 = vadd.f32 %v1020, %v1021
  %v1023 = vrot.slane %v1022, 2
  %v1024 = vadd.f32 %v1022, %v1023
  %v1025 = vrot.slane %v1024, 1
  %v1026 = vadd.f32 %v1024, %v1025
  %v1027 = vlaneseq
  %v1028 = vshrl.u32 %v1027, 7
  %v1029 = vsub.s32 0, %v1028
  %v1030 = vrot.slane %v28, %v1029
  %v1033 = vsel %vm436, %v1026, %v1019
  %1038 = vrot.lane.b32.xlu0 %v19, 112
  %v1039 = vpop.permute.xlu0 %1038
  %1040 = vrot.lane.b32.xlu0 %v20, 112
  %v1041 = vpop.permute.xlu0 %1040
  %1042 = vrot.lane.b32.xlu0 %v21, 112
  %v1043 = vpop.permute.xlu0 %1042
  %1044 = vrot.lane.b32.xlu0 %v22, 112
  %v1045 = vpop.permute.xlu0 %1044
  %v1050 = vsel %vm824, %v1033, 0
  %1052 = vmatprep.subr.mxu0 0.0
  %1053 = vmatpush1.msra.mxu0 0.0
  %1054 = vmatprep.subr.mxu0 0.0
  %1055 = vmatpush1.msra.mxu0 0.0
  %1056 = vmatprep.subr.mxu0 0.0
  %1057 = vmatpush1.msra.mxu0 0.0
  %1058 = vmatprep.subr.mxu0 0.0
  %1059 = vmatpush1.msra.mxu0 0.0
  %1060 = vmatprep.subr.mxu0 0.0
  %1061 = vmatpush1.msra.mxu0 0.0
  %1062 = vmatprep.subr.mxu0 0.0
  %1063 = vmatpush1.msra.mxu0 0.0
  %1064 = vmatprep.subr.mxu0 0.0
  %1065 = vmatpush1.msra.mxu0 0.0
  %1066 = vmatprep.subr.mxu0 0.0
  %1067 = vmatpush1.msra.mxu0 0.0
  %1068 = vmatprep.subr.mxu0 0.0
  %1069 = vmatpush1.msra.mxu0 0.0
  %1070 = vmatprep.subr.mxu0 0.0
  %1071 = vmatpush1.msra.mxu0 0.0
  %1072 = vmatprep.subr.mxu0 0.0
  %1073 = vmatpush1.msra.mxu0 0.0
  %1074 = vmatprep.subr.mxu0 0.0
  %1075 = vmatpush1.msra.mxu0 0.0
  %1076 = vmatprep.subr.mxu0 0.0
  %1077 = vmatpush1.msra.mxu0 %v1045
  %1078 = vmatprep.subr.mxu0 0.0
  %1079 = vmatpush1.msra.mxu0 %v1043
  %1080 = vmatprep.subr.mxu0 0.0
  %1081 = vmatpush1.msra.mxu0 %v1041
  %1082 = vmatprep.subr.mxu0 0.0
  %1083 = vmatpush1.msra.mxu0 %v1039
  %1084 = vmatprep.subr.mxu0 0.0
  %1085 = vmatpush2.msra.mxu0 0.0
  %1086 = vmatprep.subr.mxu0 0.0
  %1087 = vmatpush2.msra.mxu0 0.0
  %1088 = vmatprep.subr.mxu0 0.0
  %1089 = vmatpush2.msra.mxu0 0.0
  %1090 = vmatprep.subr.mxu0 0.0
  %1091 = vmatpush2.msra.mxu0 0.0
  %1092 = vmatprep.subr.mxu0 0.0
  %1093 = vmatpush2.msra.mxu0 0.0
  %1094 = vmatprep.subr.mxu0 0.0
  %1095 = vmatpush2.msra.mxu0 0.0
  %1096 = vmatprep.subr.mxu0 0.0
  %1097 = vmatpush2.msra.mxu0 0.0
  %1098 = vmatprep.subr.mxu0 0.0
  %1099 = vmatpush2.msra.mxu0 0.0
  %1100 = vmatprep.subr.mxu0 0.0
  %1101 = vmatpush2.msra.mxu0 0.0
  %1102 = vmatprep.subr.mxu0 0.0
  %1103 = vmatpush2.msra.mxu0 0.0
  %1104 = vmatprep.subr.mxu0 0.0
  %1105 = vmatpush2.msra.mxu0 0.0
  %1106 = vmatprep.subr.mxu0 0.0
  %1107 = vmatpush2.msra.mxu0 0.0
  %1108 = vmatprep.subr.mxu0 0.0
  %1109 = vmatpush2.msra.mxu0 0.0
  %1110 = vmatprep.subr.mxu0 0.0
  %1111 = vmatpush2.msra.mxu0 0.0
  %1112 = vmatprep.subr.mxu0 0.0
  %1113 = vmatpush2.msra.mxu0 0.0
  %1114 = vmatprep.subr.mxu0 0.0
  %1115 = vmatpush2.msra.mxu0 0.0
  %1116 = vmatprep.mubr.f32.mxu0 0.0
  %1117 = vmatmul.mubr.f32.gmra.mxu0 %v1050
  %v1118 = vpop.f32.mrf.mxu0
  %v1119 = vadd.f32 %v1030, %v1118
  %v1120 = vpop.f32.mrf.mxu0
  %1121 = vdwg.mxu0
  %vm1122 = vcmask 254976
  %v1123 = vsel %vm1122, %v1119, 0.0
  %1124 = vadd.xlane.f32.xlu0 %v1123
  %v1125 = vpop.xlane.xlu0 %1124
  %v1126 = vrcp.pop 32.0
  %v1127 = vmul.f32 %v1125, %v1126
  %v1128 = vsub.f32 %v1119, %v1127
  %v1129 = vmul.f32 %v1128, %v1128
  %v1130 = vsel %vm1122, %v1129, 0.0
  %1131 = vadd.xlane.f32.xlu0 %v1130
  %v1132 = vpop.xlane.xlu0 %1131
  %v1133 = vmul.f32 %v1132, %v1126
  %v1134 = vadd.f32 %v1133, 1e-05
  %v1135 = vrsqrt.pop %v1134
  %v1136 = vmul.f32 %v1128, %v1135
  %v1137 = vlaneseq
  %v1138 = vshrl.u32 %v1137, 7
  %v1139 = vsub.s32 0, %v1138
  %v1140 = vrot.slane %v29, %v1139
  %v1141 = vmul.f32 %v1136, %v1140
  %v1142 = vlaneseq
  %v1143 = vshrl.u32 %v1142, 7
  %v1144 = vsub.s32 0, %v1143
  %v1145 = vrot.slane %v30, %v1144
  %v1146 = vadd.f32 %v1141, %v1145
  %v1147 = vmul.f32 %v1146, 0.5
  %v1148 = vmul.f32 %v1146, 0.044715
  %v1149 = vmul.f32 %v1148, %v1146
  %v1150 = vmul.f32 %v1149, %v1146
  %v1151 = vadd.f32 %v1146, %v1150
  %v1152 = vmul.f32 %v1151, 0.7978846
  %v1153 = vtanh.pop %v1152
  %v1154 = vadd.f32 %v1153, 1.0
  %v1155 = vmul.f32 %v1147, %v1154
  %v1156 = vlaneseq
  %v1157 = vshrl.u32 %v1156, 7
  %v1158 = vsub.s32 0, %v1157
  %v1159 = vrot.slane %v31, %v1158
  %1160 = vrot.lane.b32.xlu0 %v19, 80
  %v1161 = vpop.permute.xlu0 %1160
  %1162 = vrot.lane.b32.xlu0 %v20, 80
  %v1163 = vpop.permute.xlu0 %1162
  %1164 = vrot.lane.b32.xlu0 %v21, 80
  %v1165 = vpop.permute.xlu0 %1164
  %1166 = vrot.lane.b32.xlu0 %v22, 80
  %v1167 = vpop.permute.xlu0 %1166
  %v1173 = vsel %vm824, %v1155, 0
  %1175 = vmatprep.subr.mxu0 0.0
  %1176 = vmatpush1.msra.mxu0 0.0
  %1177 = vmatprep.subr.mxu0 0.0
  %1178 = vmatpush1.msra.mxu0 0.0
  %1179 = vmatprep.subr.mxu0 0.0
  %1180 = vmatpush1.msra.mxu0 0.0
  %1181 = vmatprep.subr.mxu0 0.0
  %1182 = vmatpush1.msra.mxu0 0.0
  %1183 = vmatprep.subr.mxu0 0.0
  %1184 = vmatpush1.msra.mxu0 0.0
  %1185 = vmatprep.subr.mxu0 0.0
  %1186 = vmatpush1.msra.mxu0 0.0
  %1187 = vmatprep.subr.mxu0 0.0
  %1188 = vmatpush1.msra.mxu0 0.0
  %1189 = vmatprep.subr.mxu0 0.0
  %1190 = vmatpush1.msra.mxu0 0.0
  %1191 = vmatprep.subr.mxu0 0.0
  %1192 = vmatpush1.msra.mxu0 0.0
  %1193 = vmatprep.subr.mxu0 0.0
  %1194 = vmatpush1.msra.mxu0 0.0
  %1195 = vmatprep.subr.mxu0 0.0
  %1196 = vmatpush1.msra.mxu0 0.0
  %1197 = vmatprep.subr.mxu0 0.0
  %1198 = vmatpush1.msra.mxu0 0.0
  %1199 = vmatprep.subr.mxu0 0.0
  %1200 = vmatpush1.msra.mxu0 %v1167
  %1201 = vmatprep.subr.mxu0 0.0
  %1202 = vmatpush1.msra.mxu0 %v1165
  %1203 = vmatprep.subr.mxu0 0.0
  %1204 = vmatpush1.msra.mxu0 %v1163
  %1205 = vmatprep.subr.mxu0 0.0
  %1206 = vmatpush1.msra.mxu0 %v1161
  %1207 = vmatprep.subr.mxu0 0.0
  %1208 = vmatpush2.msra.mxu0 0.0
  %1209 = vmatprep.subr.mxu0 0.0
  %1210 = vmatpush2.msra.mxu0 0.0
  %1211 = vmatprep.subr.mxu0 0.0
  %1212 = vmatpush2.msra.mxu0 0.0
  %1213 = vmatprep.subr.mxu0 0.0
  %1214 = vmatpush2.msra.mxu0 0.0
  %1215 = vmatprep.subr.mxu0 0.0
  %1216 = vmatpush2.msra.mxu0 0.0
  %1217 = vmatprep.subr.mxu0 0.0
  %1218 = vmatpush2.msra.mxu0 0.0
  %1219 = vmatprep.subr.mxu0 0.0
  %1220 = vmatpush2.msra.mxu0 0.0
  %1221 = vmatprep.subr.mxu0 0.0
  %1222 = vmatpush2.msra.mxu0 0.0
  %1223 = vmatprep.subr.mxu0 0.0
  %1224 = vmatpush2.msra.mxu0 0.0
  %1225 = vmatprep.subr.mxu0 0.0
  %1226 = vmatpush2.msra.mxu0 0.0
  %1227 = vmatprep.subr.mxu0 0.0
  %1228 = vmatpush2.msra.mxu0 0.0
  %1229 = vmatprep.subr.mxu0 0.0
  %1230 = vmatpush2.msra.mxu0 0.0
  %1231 = vmatprep.subr.mxu0 0.0
  %1232 = vmatpush2.msra.mxu0 0.0
  %1233 = vmatprep.subr.mxu0 0.0
  %1234 = vmatpush2.msra.mxu0 0.0
  %1235 = vmatprep.subr.mxu0 0.0
  %1236 = vmatpush2.msra.mxu0 0.0
  %1237 = vmatprep.subr.mxu0 0.0
  %1238 = vmatpush2.msra.mxu0 0.0
  %1239 = vmatprep.mubr.f32.mxu0 0.0
  %1240 = vmatmul.mubr.f32.gmra.mxu0 %v1173
  %v1241 = vpop.f32.mrf.mxu0
  %v1242 = vadd.f32 %v1159, %v1241
  %v1243 = vpop.f32.mrf.mxu0
  %1244 = vdwg.mxu0
  %vm1245 = vcmask 123904
  %v1246 = vsel %vm1245, %v1242, 0.0
  %1247 = vadd.xlane.f32.xlu0 %v1246
  %v1248 = vpop.xlane.xlu0 %1247
  %v1249 = vrcp.pop 16.0
  %v1250 = vmul.f32 %v1248, %v1249
  %v1251 = vsub.f32 %v1242, %v1250
  %v1252 = vmul.f32 %v1251, %v1251
  %v1253 = vsel %vm1245, %v1252, 0.0
  %1254 = vadd.xlane.f32.xlu0 %v1253
  %v1255 = vpop.xlane.xlu0 %1254
  %v1256 = vmul.f32 %v1255, %v1249
  %v1257 = vadd.f32 %v1256, 1e-05
  %v1258 = vrsqrt.pop %v1257
  %v1259 = vmul.f32 %v1251, %v1258
  %v1260 = vlaneseq
  %v1261 = vshrl.u32 %v1260, 7
  %v1262 = vsub.s32 0, %v1261
  %v1263 = vrot.slane %v32, %v1262
  %v1264 = vmul.f32 %v1259, %v1263
  %v1265 = vlaneseq
  %v1266 = vshrl.u32 %v1265, 7
  %v1267 = vsub.s32 0, %v1266
  %v1268 = vrot.slane %v33, %v1267
  %v1269 = vadd.f32 %v1264, %v1268
  %v1270 = vmul.f32 %v1269, 0.5
  %v1271 = vmul.f32 %v1269, 0.044715
  %v1272 = vmul.f32 %v1271, %v1269
  %v1273 = vmul.f32 %v1272, %v1269
  %v1274 = vadd.f32 %v1269, %v1273
  %v1275 = vmul.f32 %v1274, 0.7978846
  %v1276 = vtanh.pop %v1275
  %v1277 = vadd.f32 %v1276, 1.0
  %v1278 = vmul.f32 %v1270, %v1277
  %v1279 = vlaneseq
  %v1280 = vshrl.u32 %v1279, 7
  %v1281 = vsub.s32 0, %v1280
  %v1282 = vrot.slane %v34, %v1281
  %1283 = vrot.lane.b32.xlu0 %v19, 64
  %v1284 = vpop.permute.xlu0 %1283
  %1285 = vrot.lane.b32.xlu0 %v20, 64
  %v1286 = vpop.permute.xlu0 %1285
  %vm1289 = vcmask 130048
  %v1291 = vsel %vm1289, %v1278, 0
  %1293 = vmatprep.subr.mxu0 0.0
  %1294 = vmatpush1.msra.mxu0 0.0
  %1295 = vmatprep.subr.mxu0 0.0
  %1296 = vmatpush1.msra.mxu0 0.0
  %1297 = vmatprep.subr.mxu0 0.0
  %1298 = vmatpush1.msra.mxu0 0.0
  %1299 = vmatprep.subr.mxu0 0.0
  %1300 = vmatpush1.msra.mxu0 0.0
  %1301 = vmatprep.subr.mxu0 0.0
  %1302 = vmatpush1.msra.mxu0 0.0
  %1303 = vmatprep.subr.mxu0 0.0
  %1304 = vmatpush1.msra.mxu0 0.0
  %1305 = vmatprep.subr.mxu0 0.0
  %1306 = vmatpush1.msra.mxu0 0.0
  %1307 = vmatprep.subr.mxu0 0.0
  %1308 = vmatpush1.msra.mxu0 0.0
  %1309 = vmatprep.subr.mxu0 0.0
  %1310 = vmatpush1.msra.mxu0 0.0
  %1311 = vmatprep.subr.mxu0 0.0
  %1312 = vmatpush1.msra.mxu0 0.0
  %1313 = vmatprep.subr.mxu0 0.0
  %1314 = vmatpush1.msra.mxu0 0.0
  %1315 = vmatprep.subr.mxu0 0.0
  %1316 = vmatpush1.msra.mxu0 0.0
  %1317 = vmatprep.subr.mxu0 0.0
  %1318 = vmatpush1.msra.mxu0 0.0
  %1319 = vmatprep.subr.mxu0 0.0
  %1320 = vmatpush1.msra.mxu0 0.0
  %1321 = vmatprep.subr.mxu0 0.0
  %1322 = vmatpush1.msra.mxu0 %v1286
  %1323 = vmatprep.subr.mxu0 0.0
  %1324 = vmatpush1.msra.mxu0 %v1284
  %1325 = vmatprep.subr.mxu0 0.0
  %1326 = vmatpush2.msra.mxu0 0.0
  %1327 = vmatprep.subr.mxu0 0.0
  %1328 = vmatpush2.msra.mxu0 0.0
  %1329 = vmatprep.subr.mxu0 0.0
  %1330 = vmatpush2.msra.mxu0 0.0
  %1331 = vmatprep.subr.mxu0 0.0
  %1332 = vmatpush2.msra.mxu0 0.0
  %1333 = vmatprep.subr.mxu0 0.0
  %1334 = vmatpush2.msra.mxu0 0.0
  %1335 = vmatprep.subr.mxu0 0.0
  %1336 = vmatpush2.msra.mxu0 0.0
  %1337 = vmatprep.subr.mxu0 0.0
  %1338 = vmatpush2.msra.mxu0 0.0
  %1339 = vmatprep.subr.mxu0 0.0
  %1340 = vmatpush2.msra.mxu0 0.0
  %1341 = vmatprep.subr.mxu0 0.0
  %1342 = vmatpush2.msra.mxu0 0.0
  %1343 = vmatprep.subr.mxu0 0.0
  %1344 = vmatpush2.msra.mxu0 0.0
  %1345 = vmatprep.subr.mxu0 0.0
  %1346 = vmatpush2.msra.mxu0 0.0
  %1347 = vmatprep.subr.mxu0 0.0
  %1348 = vmatpush2.msra.mxu0 0.0
  %1349 = vmatprep.subr.mxu0 0.0
  %1350 = vmatpush2.msra.mxu0 0.0
  %1351 = vmatprep.subr.mxu0 0.0
  %1352 = vmatpush2.msra.mxu0 0.0
  %1353 = vmatprep.subr.mxu0 0.0
  %1354 = vmatpush2.msra.mxu0 0.0
  %1355 = vmatprep.subr.mxu0 0.0
  %1356 = vmatpush2.msra.mxu0 0.0
  %1357 = vmatprep.mubr.f32.mxu0 0.0
  %1358 = vmatmul.mubr.f32.gmra.mxu0 %v1291
  %v1359 = vpop.f32.mrf.mxu0
  %v1360 = vadd.f32 %v1282, %v1359
  %v1361 = vpop.f32.mrf.mxu0
  %1362 = vdwg.mxu0
  %v1363 = vadd.s32 %v403, 4294967294
  %v1364 = vlaneseq
  %v1365 = vshrl.u32 %v1364, 7
  %v1366 = vsub.s32 %v1363, %v1365
  %v1367 = vrot.slane %v1003, %v1366
  %v1368 = vlaneseq
  %v1369 = vshrl.u32 %v1368, 7
  %v1370 = vsub.s32 %v1363, %v1369
  %v1371 = vrot.slane %v1008, %v1370
  %v1372 = vsel %vm436, %v1371, %v1367
  %vm1374 = vcmask 15360
  %v1375 = vsel %vm1374, %v1360, %v1372
  %vm1376 = vcmask 48128
  %v1377 = vsel %vm1376, %v1375, 0.0
  %1378 = vst [vmem:[%s3] sm:$0x3] %v1377
  // Predicated region
  $region14: #{ts_classification_forward.1} parent=0 // pred_check
    _
  $region15: #{ts_classification_forward.1} parent=0 // pred_check_branch
    %1380 = sbr.rel (0) target = $region17
  $region16: #{ts_classification_forward.1} parent=0 // pred_region
    _
  $region17: #{ts_classification_forward.1} parent=0 // pred_fallthru
    _
  // Predicated region
  $region18: #{ts_classification_forward.1} parent=0 // pred_check
    _
  $region19: #{ts_classification_forward.1} parent=0 // pred_check_branch
    %1382 = sbr.rel (0) target = $region21
  $region20: #{ts_classification_forward.1} parent=0 // pred_region
    _
  $region21: #{ts_classification_forward.1} parent=0 // pred_fallthru
    _

</llo_original>
